<compile_context>
chip_gen: v7x
topology: tpu7x:2x2x1
jax: 0.10.0
libtpu: 0.0.40
codegen_flags: <defaults>
</compile_context>

<pallas_src>
import jax
import jax.numpy as jnp
from jax import lax
from jax.experimental import pallas as pl
from jax.experimental.pallas import tpu as pltpu


def _round_up(n, m):
    return -(-n // m) * m


def _pack_gates(w3, b3, lane_multiple=128):
    """[3, in, H] / [3, 1, H] (gate order r,z,n) -> [in, G] / [1, G],
    G = 3H rounded up to a lane-dense multiple (padded columns are zero)."""
    w = jnp.concatenate([w3[0], w3[1], w3[2]], axis=-1)      # [in, 3H]
    b = jnp.concatenate([b3[0], b3[1], b3[2]], axis=-1)      # [1, 3H]
    three_h = w.shape[-1]
    g = _round_up(three_h, lane_multiple)
    w = jnp.pad(w, ((0, 0), (0, g - three_h)))
    b = jnp.pad(b, ((0, 0), (0, g - three_h)))
    return w, b


def _rnn_kernel(emb_ref, mask_ref,
                wi0_ref, wh0_ref, bi0_ref, bh0_ref,
                wi1_ref, wh1_ref, bi1_ref, bh1_ref,
                wf_ref, bf_ref,
                out_ref, xp_ref, seq_ref):
    TB = emb_ref.shape[0]
    H = seq_ref.shape[1]
    B = out_ref.shape[0]
    T = TB // B

    def run_layer(wh_ref, bh_ref, write_seq):
        # Per-layer scoping of recurrent weights: only [H, G] bf16 + [1, G] f32
        # are live across the time loop (no vreg spill pressure).
        wh = wh_ref[...]                  # bf16 [H, G]
        bh = bh_ref[...]                  # f32  [1, G]
        h = jnp.zeros((B, H), jnp.float32)
        # Static unroll (T small & static): h stays vreg-resident, no per-step
        # VMEM round-trip; all row slices are static.
        for t in range(T):
            rows = slice(t * B, (t + 1) * B)
            xp = xp_ref[rows, :]          # [B, G]  precomputed x@Wi + bi
            hp = jnp.dot(h.astype(jnp.bfloat16), wh,
                         preferred_element_type=jnp.float32) + bh   # [B, G]
            # PyTorch GRU gate order r, z, n (f32 elementwise math).
            r = jax.nn.sigmoid(xp[:, 0:H] + hp[:, 0:H])
            z = jax.nn.sigmoid(xp[:, H:2 * H] + hp[:, H:2 * H])
            n = jnp.tanh(xp[:, 2 * H:3 * H] + r * hp[:, 2 * H:3 * H])
            h_new = (1.0 - z) * n + z * h
            m = mask_ref[rows, :]         # [B, 1] packed-sequence mask
            h = m * h_new + (1.0 - m) * h
            if write_seq:
                seq_ref[rows, :] = h      # layer-0 outputs -> layer-1 inputs
        return h

    # ----- layer 0: one batched fused-gate input projection, then recurrence ---
    xp_ref[...] = (jnp.dot(emb_ref[...], wi0_ref[...],
                           preferred_element_type=jnp.float32) + bi0_ref[...])
    run_layer(wh0_ref, bh0_ref, write_seq=True)

    # TODO(synk): nn.GRU inter-layer dropout is train-only; eval forward is identity.

    # ----- layer 1: batched input projection over layer-0's output sequence ----
    xp_ref[...] = (jnp.dot(seq_ref[...].astype(jnp.bfloat16), wi1_ref[...],
                           preferred_element_type=jnp.float32) + bi1_ref[...])
    h_last = run_layer(wh1_ref, bh1_ref, write_seq=False)

    # ----- classifier on hn[-1] (final hidden of the last layer) ---------------
    out_ref[...] = (jnp.dot(h_last.astype(jnp.bfloat16), wf_ref[...],
                            preferred_element_type=jnp.float32) + bf_ref[...])


def recurrent_network_forward(x, params):
    B, T = x.shape
    E = params['vecs'].shape[1]
    H = params['wh0'].shape[-1]
    L = params['wf'].shape[-1]

    # Embedding gather + mask + weight packing are glue in plain JAX.
    emb = params['vecs'][x].astype(jnp.float32)                       # [B, T, E]
    emb_tm = jnp.transpose(emb, (1, 0, 2)).reshape(T * B, E)          # time-major rows
    emb_tm = emb_tm.astype(jnp.bfloat16)

    lens = jnp.sum((x != 0).astype(jnp.int32), axis=1)                # [B]
    mask = (jnp.arange(T)[:, None] < lens[None, :]).astype(jnp.float32)  # [T, B]
    mask = mask.reshape(T * B, 1)

    wi0, bi0 = _pack_gates(params['wi0'], params['bi0'])
    wh0, bh0 = _pack_gates(params['wh0'], params['bh0'])
    wi1, bi1 = _pack_gates(params['wi1'], params['bi1'])
    wh1, bh1 = _pack_gates(params['wh1'], params['bh1'])
    G = wi0.shape[-1]                                                 # 3H padded to 128

    bf16 = lambda w: w.astype(jnp.bfloat16)
    vmem = pl.BlockSpec(memory_space=pltpu.MemorySpace.VMEM)

    # TODO(synk): for production B/T/H, add a batch-parallel grid (B tiles of 8,
    # dimension_semantics=("parallel",)) for v7x's 2nd TensorCore and pipeline
    # emb tiles instead of keeping the full sequence resident in VMEM.
    return pl.pallas_call(
        _rnn_kernel,
        out_shape=jax.ShapeDtypeStruct((B, L), jnp.float32),
        in_specs=[vmem] * 12,
        out_specs=vmem,
        scratch_shapes=[pltpu.VMEM((T * B, G), jnp.float32),   # fused gate pre-activations
                        pltpu.VMEM((T * B, H), jnp.float32)],  # layer-0 output sequence
    )(emb_tm, mask,
      bf16(wi0), bf16(wh0), bi0, bh0,
      bf16(wi1), bf16(wh1), bi1, bh1,
      bf16(params['wf']), params['bf'])


def reference_forward(x, p):
    """Pure-JAX reference with identical semantics (for verification)."""
    emb = p['vecs'][x].astype(jnp.float32)
    B, T, _ = emb.shape
    H = p['wh0'].shape[-1]
    lens = jnp.sum((x != 0).astype(jnp.int32), axis=1)
    mask = (jnp.arange(T)[None, :] < lens[:, None]).astype(jnp.float32)  # [B, T]

    def run_layer(seq, wi, wh, bi, bh):
        def step(h, tup):
            x_t, m_t = tup
            m = m_t[:, None]
            r = jax.nn.sigmoid(x_t @ wi[0] + bi[0] + h @ wh[0] + bh[0])
            z = jax.nn.sigmoid(x_t @ wi[1] + bi[1] + h @ wh[1] + bh[1])
            n = jnp.tanh(x_t @ wi[2] + bi[2] + r * (h @ wh[2] + bh[2]))
            h_new = (1.0 - z) * n + z * h
            h_upd = m * h_new + (1.0 - m) * h
            return h_upd, h_upd
        hT, outs = lax.scan(step, jnp.zeros((B, H), jnp.float32),
                            (jnp.transpose(seq, (1, 0, 2)), mask.T))
        return hT, jnp.transpose(outs, (1, 0, 2))

    _, out0 = run_layer(emb, p['wi0'], p['wh0'], p['bi0'], p['bh0'])
    hT, _ = run_layer(out0, p['wi1'], p['wh1'], p['bi1'], p['bh1'])
    return hT @ p['wf'] + p['bf']


if __name__ == "__main__":
    V, E, H, L = 20, 16, 32, 4     # vocab, embed_dim, hidden_dim, num_labels
    B, T = 2, 8                    # batch, seq (num_layers = 2)

    key = jax.random.PRNGKey(0)
    ks = jax.random.split(key, 13)
    k = 1.0 / float(jnp.sqrt(jnp.float32(H)))

    params = dict(
        vecs=jax.random.normal(ks[0], (V, E), jnp.float32) * 0.1,
        wi0=jax.random.uniform(ks[1], (3, E, H), jnp.float32, -k, k),
        wh0=jax.random.uniform(ks[2], (3, H, H), jnp.float32, -k, k),
        bi0=jax.random.uniform(ks[3], (3, 1, H), jnp.float32, -k, k),
        bh0=jax.random.uniform(ks[4], (3, 1, H), jnp.float32, -k, k),
        wi1=jax.random.uniform(ks[5], (3, H, H), jnp.float32, -k, k),
        wh1=jax.random.uniform(ks[6], (3, H, H), jnp.float32, -k, k),
        bi1=jax.random.uniform(ks[7], (3, 1, H), jnp.float32, -k, k),
        bh1=jax.random.uniform(ks[8], (3, 1, H), jnp.float32, -k, k),
        wf=jax.random.uniform(ks[9], (H, L), jnp.float32, -k, k),
        bf=jax.random.uniform(ks[10], (1, L), jnp.float32, -k, k),
    )

    # Token ids with zero padding at the tail (sequence lengths [8, 5]).
    ids = jax.random.randint(ks[11], (B, T), 1, V)
    seq_lens = jnp.array([T, 5], jnp.int32)
    valid = jnp.arange(T)[None, :] < seq_lens[:, None]
    x = jnp.where(valid, ids, 0).astype(jnp.int32)

    pred = jax.jit(recurrent_network_forward)(x, params)
    pred = jax.block_until_ready(pred)

    ref = reference_forward(x, params)
    assert pred.shape == (B, L), pred.shape
    assert jnp.allclose(pred, ref, atol=2e-2, rtol=2e-2), (pred, ref)
    print("KERNEL_OK")
</pallas_src>

<mosaic_0001>
module attributes {stable_mosaic.version = 11 : i64} {
  func.func @_rnn_kernel(%arg0: memref<16x16xbf16, #tpu.memory_space<vmem>>, %arg1: memref<16x1xf32, #tpu.memory_space<vmem>>, %arg2: memref<16x128xbf16, #tpu.memory_space<vmem>>, %arg3: memref<32x128xbf16, #tpu.memory_space<vmem>>, %arg4: memref<1x128xf32, #tpu.memory_space<vmem>>, %arg5: memref<1x128xf32, #tpu.memory_space<vmem>>, %arg6: memref<32x128xbf16, #tpu.memory_space<vmem>>, %arg7: memref<32x128xbf16, #tpu.memory_space<vmem>>, %arg8: memref<1x128xf32, #tpu.memory_space<vmem>>, %arg9: memref<1x128xf32, #tpu.memory_space<vmem>>, %arg10: memref<32x4xbf16, #tpu.memory_space<vmem>>, %arg11: memref<1x4xf32, #tpu.memory_space<vmem>>, %arg12: memref<2x4xf32, #tpu.memory_space<vmem>>, %arg13: memref<16x128xf32, #tpu.memory_space<vmem>>, %arg14: memref<16x32xf32, #tpu.memory_space<vmem>>) attributes {dimension_semantics = [], scalar_prefetch = 0 : i64, scratch_operands = 2 : i64, tpu.core_type = #tpu.core_type<tc>} {
    %c0 = arith.constant 0 : index
    %c0_0 = arith.constant 0 : index
    %0 = vector.load %arg0[%c0, %c0_0] : memref<16x16xbf16, #tpu.memory_space<vmem>>, vector<16x16xbf16>
    %c0_1 = arith.constant 0 : index
    %c0_2 = arith.constant 0 : index
    %1 = vector.load %arg2[%c0_1, %c0_2] : memref<16x128xbf16, #tpu.memory_space<vmem>>, vector<16x128xbf16>
    %cst = arith.constant dense<0.000000e+00> : vector<16x128xf32>
    %2 = tpu.matmul %0, %1, %cst {dimension_numbers = #tpu.dot_dimension_numbers<[1], [0], [0], [1], [0, 0, 1, 1], [], []>} : vector<16x16xbf16>, vector<16x128xbf16>, vector<16x128xf32> -> vector<16x128xf32>
    %c0_3 = arith.constant 0 : index
    %c0_4 = arith.constant 0 : index
    %3 = vector.load %arg4[%c0_3, %c0_4] : memref<1x128xf32, #tpu.memory_space<vmem>>, vector<1x128xf32>
    %4 = vector.broadcast %3 : vector<1x128xf32> to vector<16x128xf32>
    %5 = arith.addf %2, %4 : vector<16x128xf32>
    %c0_5 = arith.constant 0 : index
    %c0_6 = arith.constant 0 : index
    %6 = vector.load %arg13[%c0_5, %c0_6] : memref<16x128xf32, #tpu.memory_space<vmem>>, vector<16x128xf32>
    tpu.vector_store %arg13[%c0_5, %c0_6], %5 {strides = array<i32>} : memref<16x128xf32, #tpu.memory_space<vmem>>, vector<16x128xf32>,
    %c0_7 = arith.constant 0 : index
    %c0_8 = arith.constant 0 : index
    %7 = vector.load %arg3[%c0_7, %c0_8] : memref<32x128xbf16, #tpu.memory_space<vmem>>, vector<32x128xbf16>
    %c0_9 = arith.constant 0 : index
    %c0_10 = arith.constant 0 : index
    %8 = vector.load %arg5[%c0_9, %c0_10] : memref<1x128xf32, #tpu.memory_space<vmem>>, vector<1x128xf32>
    %cst_11 = arith.constant 0.000000e+00 : f32
    %9 = vector.broadcast %cst_11 : f32 to vector<2x32xf32>
    %c0_12 = arith.constant 0 : index
    %c0_13 = arith.constant 0 : index
    %10 = vector.load %arg13[%c0_12, %c0_13] : memref<16x128xf32, #tpu.memory_space<vmem>>, vector<2x128xf32>
    %11 = arith.truncf %9 : vector<2x32xf32> to vector<2x32xbf16>
    %cst_14 = arith.constant dense<0.000000e+00> : vector<2x128xf32>
    %12 = tpu.matmul %11, %7, %cst_14 {dimension_numbers = #tpu.dot_dimension_numbers<[1], [0], [0], [1], [0, 0, 1, 1], [], []>} : vector<2x32xbf16>, vector<32x128xbf16>, vector<2x128xf32> -> vector<2x128xf32>
    %13 = vector.broadcast %8 : vector<1x128xf32> to vector<2x128xf32>
    %14 = arith.addf %12, %13 : vector<2x128xf32>
    %15 = vector.extract_strided_slice %10 {offsets = [0, 0], sizes = [2, 32], strides = [1, 1]} : vector<2x128xf32> to vector<2x32xf32>
    %16 = vector.extract_strided_slice %14 {offsets = [0, 0], sizes = [2, 32], strides = [1, 1]} : vector<2x128xf32> to vector<2x32xf32>
    %17 = arith.addf %15, %16 : vector<2x32xf32>
    %18 = arith.negf %17 : vector<2x32xf32>
    %19 = math.exp %18 : vector<2x32xf32>
    %cst_15 = arith.constant 1.000000e+00 : f32
    %20 = vector.broadcast %cst_15 : f32 to vector<2x32xf32>
    %21 = arith.addf %20, %19 : vector<2x32xf32>
    %22 = arith.divf %20, %21 : vector<2x32xf32>
    %23 = vector.extract_strided_slice %10 {offsets = [0, 32], sizes = [2, 32], strides = [1, 1]} : vector<2x128xf32> to vector<2x32xf32>
    %24 = vector.extract_strided_slice %14 {offsets = [0, 32], sizes = [2, 32], strides = [1, 1]} : vector<2x128xf32> to vector<2x32xf32>
    %25 = arith.addf %23, %24 : vector<2x32xf32>
    %26 = arith.negf %25 : vector<2x32xf32>
    %27 = math.exp %26 : vector<2x32xf32>
    %cst_16 = arith.constant 1.000000e+00 : f32
    %28 = vector.broadcast %cst_16 : f32 to vector<2x32xf32>
    %29 = arith.addf %28, %27 : vector<2x32xf32>
    %30 = arith.divf %28, %29 : vector<2x32xf32>
    %31 = vector.extract_strided_slice %10 {offsets = [0, 64], sizes = [2, 32], strides = [1, 1]} : vector<2x128xf32> to vector<2x32xf32>
    %32 = vector.extract_strided_slice %14 {offsets = [0, 64], sizes = [2, 32], strides = [1, 1]} : vector<2x128xf32> to vector<2x32xf32>
    %33 = arith.mulf %22, %32 : vector<2x32xf32>
    %34 = arith.addf %31, %33 : vector<2x32xf32>
    %35 = math.tanh %34 : vector<2x32xf32>
    %cst_17 = arith.constant 1.000000e+00 : f32
    %36 = vector.broadcast %cst_17 : f32 to vector<2x32xf32>
    %37 = arith.subf %36, %30 : vector<2x32xf32>
    %38 = arith.mulf %37, %35 : vector<2x32xf32>
    %39 = arith.mulf %30, %9 : vector<2x32xf32>
    %40 = arith.addf %38, %39 : vector<2x32xf32>
    %c0_18 = arith.constant 0 : index
    %c0_19 = arith.constant 0 : index
    %41 = vector.load %arg1[%c0_18, %c0_19] : memref<16x1xf32, #tpu.memory_space<vmem>>, vector<2x1xf32>
    %42 = vector.broadcast %41 : vector<2x1xf32> to vector<2x32xf32>
    %43 = arith.mulf %42, %40 : vector<2x32xf32>
    %cst_20 = arith.constant 1.000000e+00 : f32
    %44 = vector.broadcast %cst_20 : f32 to vector<2x1xf32>
    %45 = arith.subf %44, %41 : vector<2x1xf32>
    %46 = vector.broadcast %45 : vector<2x1xf32> to vector<2x32xf32>
    %47 = arith.mulf %46, %9 : vector<2x32xf32>
    %48 = arith.addf %43, %47 : vector<2x32xf32>
    %c0_21 = arith.constant 0 : index
    %c0_22 = arith.constant 0 : index
    %49 = vector.load %arg14[%c0_21, %c0_22] : memref<16x32xf32, #tpu.memory_space<vmem>>, vector<2x32xf32>
    tpu.vector_store %arg14[%c0_21, %c0_22], %48 {strides = array<i32>} : memref<16x32xf32, #tpu.memory_space<vmem>>, vector<2x32xf32>,
    %c2 = arith.constant 2 : index
    %c0_23 = arith.constant 0 : index
    %50 = vector.load %arg13[%c2, %c0_23] : memref<16x128xf32, #tpu.memory_space<vmem>>, vector<2x128xf32>
    %51 = arith.truncf %48 : vector<2x32xf32> to vector<2x32xbf16>
    %cst_24 = arith.constant dense<0.000000e+00> : vector<2x128xf32>
    %52 = tpu.matmul %51, %7, %cst_24 {dimension_numbers = #tpu.dot_dimension_numbers<[1], [0], [0], [1], [0, 0, 1, 1], [], []>} : vector<2x32xbf16>, vector<32x128xbf16>, vector<2x128xf32> -> vector<2x128xf32>
    %53 = vector.broadcast %8 : vector<1x128xf32> to vector<2x128xf32>
    %54 = arith.addf %52, %53 : vector<2x128xf32>
    %55 = vector.extract_strided_slice %50 {offsets = [0, 0], sizes = [2, 32], strides = [1, 1]} : vector<2x128xf32> to vector<2x32xf32>
    %56 = vector.extract_strided_slice %54 {offsets = [0, 0], sizes = [2, 32], strides = [1, 1]} : vector<2x128xf32> to vector<2x32xf32>
    %57 = arith.addf %55, %56 : vector<2x32xf32>
    %58 = arith.negf %57 : vector<2x32xf32>
    %59 = math.exp %58 : vector<2x32xf32>
    %cst_25 = arith.constant 1.000000e+00 : f32
    %60 = vector.broadcast %cst_25 : f32 to vector<2x32xf32>
    %61 = arith.addf %60, %59 : vector<2x32xf32>
    %62 = arith.divf %60, %61 : vector<2x32xf32>
    %63 = vector.extract_strided_slice %50 {offsets = [0, 32], sizes = [2, 32], strides = [1, 1]} : vector<2x128xf32> to vector<2x32xf32>
    %64 = vector.extract_strided_slice %54 {offsets = [0, 32], sizes = [2, 32], strides = [1, 1]} : vector<2x128xf32> to vector<2x32xf32>
    %65 = arith.addf %63, %64 : vector<2x32xf32>
    %66 = arith.negf %65 : vector<2x32xf32>
    %67 = math.exp %66 : vector<2x32xf32>
    %cst_26 = arith.constant 1.000000e+00 : f32
    %68 = vector.broadcast %cst_26 : f32 to vector<2x32xf32>
    %69 = arith.addf %68, %67 : vector<2x32xf32>
    %70 = arith.divf %68, %69 : vector<2x32xf32>
    %71 = vector.extract_strided_slice %50 {offsets = [0, 64], sizes = [2, 32], strides = [1, 1]} : vector<2x128xf32> to vector<2x32xf32>
    %72 = vector.extract_strided_slice %54 {offsets = [0, 64], sizes = [2, 32], strides = [1, 1]} : vector<2x128xf32> to vector<2x32xf32>
    %73 = arith.mulf %62, %72 : vector<2x32xf32>
    %74 = arith.addf %71, %73 : vector<2x32xf32>
    %75 = math.tanh %74 : vector<2x32xf32>
    %cst_27 = arith.constant 1.000000e+00 : f32
    %76 = vector.broadcast %cst_27 : f32 to vector<2x32xf32>
    %77 = arith.subf %76, %70 : vector<2x32xf32>
    %78 = arith.mulf %77, %75 : vector<2x32xf32>
    %79 = arith.mulf %70, %48 : vector<2x32xf32>
    %80 = arith.addf %78, %79 : vector<2x32xf32>
    %c2_28 = arith.constant 2 : index
    %c0_29 = arith.constant 0 : index
    %81 = vector.load %arg1[%c2_28, %c0_29] : memref<16x1xf32, #tpu.memory_space<vmem>>, vector<2x1xf32>
    %82 = vector.broadcast %81 : vector<2x1xf32> to vector<2x32xf32>
    %83 = arith.mulf %82, %80 : vector<2x32xf32>
    %cst_30 = arith.constant 1.000000e+00 : f32
    %84 = vector.broadcast %cst_30 : f32 to vector<2x1xf32>
    %85 = arith.subf %84, %81 : vector<2x1xf32>
    %86 = vector.broadcast %85 : vector<2x1xf32> to vector<2x32xf32>
    %87 = arith.mulf %86, %48 : vector<2x32xf32>
    %88 = arith.addf %83, %87 : vector<2x32xf32>
    %c2_31 = arith.constant 2 : index
    %c0_32 = arith.constant 0 : index
    %89 = vector.load %arg14[%c2_31, %c0_32] : memref<16x32xf32, #tpu.memory_space<vmem>>, vector<2x32xf32>
    tpu.vector_store %arg14[%c2_31, %c0_32], %88 {strides = array<i32>} : memref<16x32xf32, #tpu.memory_space<vmem>>, vector<2x32xf32>,
    %c4 = arith.constant 4 : index
    %c0_33 = arith.constant 0 : index
    %90 = vector.load %arg13[%c4, %c0_33] : memref<16x128xf32, #tpu.memory_space<vmem>>, vector<2x128xf32>
    %91 = arith.truncf %88 : vector<2x32xf32> to vector<2x32xbf16>
    %cst_34 = arith.constant dense<0.000000e+00> : vector<2x128xf32>
    %92 = tpu.matmul %91, %7, %cst_34 {dimension_numbers = #tpu.dot_dimension_numbers<[1], [0], [0], [1], [0, 0, 1, 1], [], []>} : vector<2x32xbf16>, vector<32x128xbf16>, vector<2x128xf32> -> vector<2x128xf32>
    %93 = vector.broadcast %8 : vector<1x128xf32> to vector<2x128xf32>
    %94 = arith.addf %92, %93 : vector<2x128xf32>
    %95 = vector.extract_strided_slice %90 {offsets = [0, 0], sizes = [2, 32], strides = [1, 1]} : vector<2x128xf32> to vector<2x32xf32>
    %96 = vector.extract_strided_slice %94 {offsets = [0, 0], sizes = [2, 32], strides = [1, 1]} : vector<2x128xf32> to vector<2x32xf32>
    %97 = arith.addf %95, %96 : vector<2x32xf32>
    %98 = arith.negf %97 : vector<2x32xf32>
    %99 = math.exp %98 : vector<2x32xf32>
    %cst_35 = arith.constant 1.000000e+00 : f32
    %100 = vector.broadcast %cst_35 : f32 to vector<2x32xf32>
    %101 = arith.addf %100, %99 : vector<2x32xf32>
    %102 = arith.divf %100, %101 : vector<2x32xf32>
    %103 = vector.extract_strided_slice %90 {offsets = [0, 32], sizes = [2, 32], strides = [1, 1]} : vector<2x128xf32> to vector<2x32xf32>
    %104 = vector.extract_strided_slice %94 {offsets = [0, 32], sizes = [2, 32], strides = [1, 1]} : vector<2x128xf32> to vector<2x32xf32>
    %105 = arith.addf %103, %104 : vector<2x32xf32>
    %106 = arith.negf %105 : vector<2x32xf32>
    %107 = math.exp %106 : vector<2x32xf32>
    %cst_36 = arith.constant 1.000000e+00 : f32
    %108 = vector.broadcast %cst_36 : f32 to vector<2x32xf32>
    %109 = arith.addf %108, %107 : vector<2x32xf32>
    %110 = arith.divf %108, %109 : vector<2x32xf32>
    %111 = vector.extract_strided_slice %90 {offsets = [0, 64], sizes = [2, 32], strides = [1, 1]} : vector<2x128xf32> to vector<2x32xf32>
    %112 = vector.extract_strided_slice %94 {offsets = [0, 64], sizes = [2, 32], strides = [1, 1]} : vector<2x128xf32> to vector<2x32xf32>
    %113 = arith.mulf %102, %112 : vector<2x32xf32>
    %114 = arith.addf %111, %113 : vector<2x32xf32>
    %115 = math.tanh %114 : vector<2x32xf32>
    %cst_37 = arith.constant 1.000000e+00 : f32
    %116 = vector.broadcast %cst_37 : f32 to vector<2x32xf32>
    %117 = arith.subf %116, %110 : vector<2x32xf32>
    %118 = arith.mulf %117, %115 : vector<2x32xf32>
    %119 = arith.mulf %110, %88 : vector<2x32xf32>
    %120 = arith.addf %118, %119 : vector<2x32xf32>
    %c4_38 = arith.constant 4 : index
    %c0_39 = arith.constant 0 : index
    %121 = vector.load %arg1[%c4_38, %c0_39] : memref<16x1xf32, #tpu.memory_space<vmem>>, vector<2x1xf32>
    %122 = vector.broadcast %121 : vector<2x1xf32> to vector<2x32xf32>
    %123 = arith.mulf %122, %120 : vector<2x32xf32>
    %cst_40 = arith.constant 1.000000e+00 : f32
    %124 = vector.broadcast %cst_40 : f32 to vector<2x1xf32>
    %125 = arith.subf %124, %121 : vector<2x1xf32>
    %126 = vector.broadcast %125 : vector<2x1xf32> to vector<2x32xf32>
    %127 = arith.mulf %126, %88 : vector<2x32xf32>
    %128 = arith.addf %123, %127 : vector<2x32xf32>
    %c4_41 = arith.constant 4 : index
    %c0_42 = arith.constant 0 : index
    %129 = vector.load %arg14[%c4_41, %c0_42] : memref<16x32xf32, #tpu.memory_space<vmem>>, vector<2x32xf32>
    tpu.vector_store %arg14[%c4_41, %c0_42], %128 {strides = array<i32>} : memref<16x32xf32, #tpu.memory_space<vmem>>, vector<2x32xf32>,
    %c6 = arith.constant 6 : index
    %c0_43 = arith.constant 0 : index
    %130 = vector.load %arg13[%c6, %c0_43] : memref<16x128xf32, #tpu.memory_space<vmem>>, vector<2x128xf32>
    %131 = arith.truncf %128 : vector<2x32xf32> to vector<2x32xbf16>
    %cst_44 = arith.constant dense<0.000000e+00> : vector<2x128xf32>
    %132 = tpu.matmul %131, %7, %cst_44 {dimension_numbers = #tpu.dot_dimension_numbers<[1], [0], [0], [1], [0, 0, 1, 1], [], []>} : vector<2x32xbf16>, vector<32x128xbf16>, vector<2x128xf32> -> vector<2x128xf32>
    %133 = vector.broadcast %8 : vector<1x128xf32> to vector<2x128xf32>
    %134 = arith.addf %132, %133 : vector<2x128xf32>
    %135 = vector.extract_strided_slice %130 {offsets = [0, 0], sizes = [2, 32], strides = [1, 1]} : vector<2x128xf32> to vector<2x32xf32>
    %136 = vector.extract_strided_slice %134 {offsets = [0, 0], sizes = [2, 32], strides = [1, 1]} : vector<2x128xf32> to vector<2x32xf32>
    %137 = arith.addf %135, %136 : vector<2x32xf32>
    %138 = arith.negf %137 : vector<2x32xf32>
    %139 = math.exp %138 : vector<2x32xf32>
    %cst_45 = arith.constant 1.000000e+00 : f32
    %140 = vector.broadcast %cst_45 : f32 to vector<2x32xf32>
    %141 = arith.addf %140, %139 : vector<2x32xf32>
    %142 = arith.divf %140, %141 : vector<2x32xf32>
    %143 = vector.extract_strided_slice %130 {offsets = [0, 32], sizes = [2, 32], strides = [1, 1]} : vector<2x128xf32> to vector<2x32xf32>
    %144 = vector.extract_strided_slice %134 {offsets = [0, 32], sizes = [2, 32], strides = [1, 1]} : vector<2x128xf32> to vector<2x32xf32>
    %145 = arith.addf %143, %144 : vector<2x32xf32>
    %146 = arith.negf %145 : vector<2x32xf32>
    %147 = math.exp %146 : vector<2x32xf32>
    %cst_46 = arith.constant 1.000000e+00 : f32
    %148 = vector.broadcast %cst_46 : f32 to vector<2x32xf32>
    %149 = arith.addf %148, %147 : vector<2x32xf32>
    %150 = arith.divf %148, %149 : vector<2x32xf32>
    %151 = vector.extract_strided_slice %130 {offsets = [0, 64], sizes = [2, 32], strides = [1, 1]} : vector<2x128xf32> to vector<2x32xf32>
    %152 = vector.extract_strided_slice %134 {offsets = [0, 64], sizes = [2, 32], strides = [1, 1]} : vector<2x128xf32> to vector<2x32xf32>
    %153 = arith.mulf %142, %152 : vector<2x32xf32>
    %154 = arith.addf %151, %153 : vector<2x32xf32>
    %155 = math.tanh %154 : vector<2x32xf32>
    %cst_47 = arith.constant 1.000000e+00 : f32
    %156 = vector.broadcast %cst_47 : f32 to vector<2x32xf32>
    %157 = arith.subf %156, %150 : vector<2x32xf32>
    %158 = arith.mulf %157, %155 : vector<2x32xf32>
    %159 = arith.mulf %150, %128 : vector<2x32xf32>
    %160 = arith.addf %158, %159 : vector<2x32xf32>
    %c6_48 = arith.constant 6 : index
    %c0_49 = arith.constant 0 : index
    %161 = vector.load %arg1[%c6_48, %c0_49] : memref<16x1xf32, #tpu.memory_space<vmem>>, vector<2x1xf32>
    %162 = vector.broadcast %161 : vector<2x1xf32> to vector<2x32xf32>
    %163 = arith.mulf %162, %160 : vector<2x32xf32>
    %cst_50 = arith.constant 1.000000e+00 : f32
    %164 = vector.broadcast %cst_50 : f32 to vector<2x1xf32>
    %165 = arith.subf %164, %161 : vector<2x1xf32>
    %166 = vector.broadcast %165 : vector<2x1xf32> to vector<2x32xf32>
    %167 = arith.mulf %166, %128 : vector<2x32xf32>
    %168 = arith.addf %163, %167 : vector<2x32xf32>
    %c6_51 = arith.constant 6 : index
    %c0_52 = arith.constant 0 : index
    %169 = vector.load %arg14[%c6_51, %c0_52] : memref<16x32xf32, #tpu.memory_space<vmem>>, vector<2x32xf32>
    tpu.vector_store %arg14[%c6_51, %c0_52], %168 {strides = array<i32>} : memref<16x32xf32, #tpu.memory_space<vmem>>, vector<2x32xf32>,
    %c8 = arith.constant 8 : index
    %c0_53 = arith.constant 0 : index
    %170 = vector.load %arg13[%c8, %c0_53] : memref<16x128xf32, #tpu.memory_space<vmem>>, vector<2x128xf32>
    %171 = arith.truncf %168 : vector<2x32xf32> to vector<2x32xbf16>
    %cst_54 = arith.constant dense<0.000000e+00> : vector<2x128xf32>
    %172 = tpu.matmul %171, %7, %cst_54 {dimension_numbers = #tpu.dot_dimension_numbers<[1], [0], [0], [1], [0, 0, 1, 1], [], []>} : vector<2x32xbf16>, vector<32x128xbf16>, vector<2x128xf32> -> vector<2x128xf32>
    %173 = vector.broadcast %8 : vector<1x128xf32> to vector<2x128xf32>
    %174 = arith.addf %172, %173 : vector<2x128xf32>
    %175 = vector.extract_strided_slice %170 {offsets = [0, 0], sizes = [2, 32], strides = [1, 1]} : vector<2x128xf32> to vector<2x32xf32>
    %176 = vector.extract_strided_slice %174 {offsets = [0, 0], sizes = [2, 32], strides = [1, 1]} : vector<2x128xf32> to vector<2x32xf32>
    %177 = arith.addf %175, %176 : vector<2x32xf32>
    %178 = arith.negf %177 : vector<2x32xf32>
    %179 = math.exp %178 : vector<2x32xf32>
    %cst_55 = arith.constant 1.000000e+00 : f32
    %180 = vector.broadcast %cst_55 : f32 to vector<2x32xf32>
    %181 = arith.addf %180, %179 : vector<2x32xf32>
    %182 = arith.divf %180, %181 : vector<2x32xf32>
    %183 = vector.extract_strided_slice %170 {offsets = [0, 32], sizes = [2, 32], strides = [1, 1]} : vector<2x128xf32> to vector<2x32xf32>
    %184 = vector.extract_strided_slice %174 {offsets = [0, 32], sizes = [2, 32], strides = [1, 1]} : vector<2x128xf32> to vector<2x32xf32>
    %185 = arith.addf %183, %184 : vector<2x32xf32>
    %186 = arith.negf %185 : vector<2x32xf32>
    %187 = math.exp %186 : vector<2x32xf32>
    %cst_56 = arith.constant 1.000000e+00 : f32
    %188 = vector.broadcast %cst_56 : f32 to vector<2x32xf32>
    %189 = arith.addf %188, %187 : vector<2x32xf32>
    %190 = arith.divf %188, %189 : vector<2x32xf32>
    %191 = vector.extract_strided_slice %170 {offsets = [0, 64], sizes = [2, 32], strides = [1, 1]} : vector<2x128xf32> to vector<2x32xf32>
    %192 = vector.extract_strided_slice %174 {offsets = [0, 64], sizes = [2, 32], strides = [1, 1]} : vector<2x128xf32> to vector<2x32xf32>
    %193 = arith.mulf %182, %192 : vector<2x32xf32>
    %194 = arith.addf %191, %193 : vector<2x32xf32>
    %195 = math.tanh %194 : vector<2x32xf32>
    %cst_57 = arith.constant 1.000000e+00 : f32
    %196 = vector.broadcast %cst_57 : f32 to vector<2x32xf32>
    %197 = arith.subf %196, %190 : vector<2x32xf32>
    %198 = arith.mulf %197, %195 : vector<2x32xf32>
    %199 = arith.mulf %190, %168 : vector<2x32xf32>
    %200 = arith.addf %198, %199 : vector<2x32xf32>
    %c8_58 = arith.constant 8 : index
    %c0_59 = arith.constant 0 : index
    %201 = vector.load %arg1[%c8_58, %c0_59] : memref<16x1xf32, #tpu.memory_space<vmem>>, vector<2x1xf32>
    %202 = vector.broadcast %201 : vector<2x1xf32> to vector<2x32xf32>
    %203 = arith.mulf %202, %200 : vector<2x32xf32>
    %cst_60 = arith.constant 1.000000e+00 : f32
    %204 = vector.broadcast %cst_60 : f32 to vector<2x1xf32>
    %205 = arith.subf %204, %201 : vector<2x1xf32>
    %206 = vector.broadcast %205 : vector<2x1xf32> to vector<2x32xf32>
    %207 = arith.mulf %206, %168 : vector<2x32xf32>
    %208 = arith.addf %203, %207 : vector<2x32xf32>
    %c8_61 = arith.constant 8 : index
    %c0_62 = arith.constant 0 : index
    %209 = vector.load %arg14[%c8_61, %c0_62] : memref<16x32xf32, #tpu.memory_space<vmem>>, vector<2x32xf32>
    tpu.vector_store %arg14[%c8_61, %c0_62], %208 {strides = array<i32>} : memref<16x32xf32, #tpu.memory_space<vmem>>, vector<2x32xf32>,
    %c10 = arith.constant 10 : index
    %c0_63 = arith.constant 0 : index
    %210 = vector.load %arg13[%c10, %c0_63] : memref<16x128xf32, #tpu.memory_space<vmem>>, vector<2x128xf32>
    %211 = arith.truncf %208 : vector<2x32xf32> to vector<2x32xbf16>
    %cst_64 = arith.constant dense<0.000000e+00> : vector<2x128xf32>
    %212 = tpu.matmul %211, %7, %cst_64 {dimension_numbers = #tpu.dot_dimension_numbers<[1], [0], [0], [1], [0, 0, 1, 1], [], []>} : vector<2x32xbf16>, vector<32x128xbf16>, vector<2x128xf32> -> vector<2x128xf32>
    %213 = vector.broadcast %8 : vector<1x128xf32> to vector<2x128xf32>
    %214 = arith.addf %212, %213 : vector<2x128xf32>
    %215 = vector.extract_strided_slice %210 {offsets = [0, 0], sizes = [2, 32], strides = [1, 1]} : vector<2x128xf32> to vector<2x32xf32>
    %216 = vector.extract_strided_slice %214 {offsets = [0, 0], sizes = [2, 32], strides = [1, 1]} : vector<2x128xf32> to vector<2x32xf32>
    %217 = arith.addf %215, %216 : vector<2x32xf32>
    %218 = arith.negf %217 : vector<2x32xf32>
    %219 = math.exp %218 : vector<2x32xf32>
    %cst_65 = arith.constant 1.000000e+00 : f32
    %220 = vector.broadcast %cst_65 : f32 to vector<2x32xf32>
    %221 = arith.addf %220, %219 : vector<2x32xf32>
    %222 = arith.divf %220, %221 : vector<2x32xf32>
    %223 = vector.extract_strided_slice %210 {offsets = [0, 32], sizes = [2, 32], strides = [1, 1]} : vector<2x128xf32> to vector<2x32xf32>
    %224 = vector.extract_strided_slice %214 {offsets = [0, 32], sizes = [2, 32], strides = [1, 1]} : vector<2x128xf32> to vector<2x32xf32>
    %225 = arith.addf %223, %224 : vector<2x32xf32>
    %226 = arith.negf %225 : vector<2x32xf32>
    %227 = math.exp %226 : vector<2x32xf32>
    %cst_66 = arith.constant 1.000000e+00 : f32
    %228 = vector.broadcast %cst_66 : f32 to vector<2x32xf32>
    %229 = arith.addf %228, %227 : vector<2x32xf32>
    %230 = arith.divf %228, %229 : vector<2x32xf32>
    %231 = vector.extract_strided_slice %210 {offsets = [0, 64], sizes = [2, 32], strides = [1, 1]} : vector<2x128xf32> to vector<2x32xf32>
    %232 = vector.extract_strided_slice %214 {offsets = [0, 64], sizes = [2, 32], strides = [1, 1]} : vector<2x128xf32> to vector<2x32xf32>
    %233 = arith.mulf %222, %232 : vector<2x32xf32>
    %234 = arith.addf %231, %233 : vector<2x32xf32>
    %235 = math.tanh %234 : vector<2x32xf32>
    %cst_67 = arith.constant 1.000000e+00 : f32
    %236 = vector.broadcast %cst_67 : f32 to vector<2x32xf32>
    %237 = arith.subf %236, %230 : vector<2x32xf32>
    %238 = arith.mulf %237, %235 : vector<2x32xf32>
    %239 = arith.mulf %230, %208 : vector<2x32xf32>
    %240 = arith.addf %238, %239 : vector<2x32xf32>
    %c10_68 = arith.constant 10 : index
    %c0_69 = arith.constant 0 : index
    %241 = vector.load %arg1[%c10_68, %c0_69] : memref<16x1xf32, #tpu.memory_space<vmem>>, vector<2x1xf32>
    %242 = vector.broadcast %241 : vector<2x1xf32> to vector<2x32xf32>
    %243 = arith.mulf %242, %240 : vector<2x32xf32>
    %cst_70 = arith.constant 1.000000e+00 : f32
    %244 = vector.broadcast %cst_70 : f32 to vector<2x1xf32>
    %245 = arith.subf %244, %241 : vector<2x1xf32>
    %246 = vector.broadcast %245 : vector<2x1xf32> to vector<2x32xf32>
    %247 = arith.mulf %246, %208 : vector<2x32xf32>
    %248 = arith.addf %243, %247 : vector<2x32xf32>
    %c10_71 = arith.constant 10 : index
    %c0_72 = arith.constant 0 : index
    %249 = vector.load %arg14[%c10_71, %c0_72] : memref<16x32xf32, #tpu.memory_space<vmem>>, vector<2x32xf32>
    tpu.vector_store %arg14[%c10_71, %c0_72], %248 {strides = array<i32>} : memref<16x32xf32, #tpu.memory_space<vmem>>, vector<2x32xf32>,
    %c12 = arith.constant 12 : index
    %c0_73 = arith.constant 0 : index
    %250 = vector.load %arg13[%c12, %c0_73] : memref<16x128xf32, #tpu.memory_space<vmem>>, vector<2x128xf32>
    %251 = arith.truncf %248 : vector<2x32xf32> to vector<2x32xbf16>
    %cst_74 = arith.constant dense<0.000000e+00> : vector<2x128xf32>
    %252 = tpu.matmul %251, %7, %cst_74 {dimension_numbers = #tpu.dot_dimension_numbers<[1], [0], [0], [1], [0, 0, 1, 1], [], []>} : vector<2x32xbf16>, vector<32x128xbf16>, vector<2x128xf32> -> vector<2x128xf32>
    %253 = vector.broadcast %8 : vector<1x128xf32> to vector<2x128xf32>
    %254 = arith.addf %252, %253 : vector<2x128xf32>
    %255 = vector.extract_strided_slice %250 {offsets = [0, 0], sizes = [2, 32], strides = [1, 1]} : vector<2x128xf32> to vector<2x32xf32>
    %256 = vector.extract_strided_slice %254 {offsets = [0, 0], sizes = [2, 32], strides = [1, 1]} : vector<2x128xf32> to vector<2x32xf32>
    %257 = arith.addf %255, %256 : vector<2x32xf32>
    %258 = arith.negf %257 : vector<2x32xf32>
    %259 = math.exp %258 : vector<2x32xf32>
    %cst_75 = arith.constant 1.000000e+00 : f32
    %260 = vector.broadcast %cst_75 : f32 to vector<2x32xf32>
    %261 = arith.addf %260, %259 : vector<2x32xf32>
    %262 = arith.divf %260, %261 : vector<2x32xf32>
    %263 = vector.extract_strided_slice %250 {offsets = [0, 32], sizes = [2, 32], strides = [1, 1]} : vector<2x128xf32> to vector<2x32xf32>
    %264 = vector.extract_strided_slice %254 {offsets = [0, 32], sizes = [2, 32], strides = [1, 1]} : vector<2x128xf32> to vector<2x32xf32>
    %265 = arith.addf %263, %264 : vector<2x32xf32>
    %266 = arith.negf %265 : vector<2x32xf32>
    %267 = math.exp %266 : vector<2x32xf32>
    %cst_76 = arith.constant 1.000000e+00 : f32
    %268 = vector.broadcast %cst_76 : f32 to vector<2x32xf32>
    %269 = arith.addf %268, %267 : vector<2x32xf32>
    %270 = arith.divf %268, %269 : vector<2x32xf32>
    %271 = vector.extract_strided_slice %250 {offsets = [0, 64], sizes = [2, 32], strides = [1, 1]} : vector<2x128xf32> to vector<2x32xf32>
    %272 = vector.extract_strided_slice %254 {offsets = [0, 64], sizes = [2, 32], strides = [1, 1]} : vector<2x128xf32> to vector<2x32xf32>
    %273 = arith.mulf %262, %272 : vector<2x32xf32>
    %274 = arith.addf %271, %273 : vector<2x32xf32>
    %275 = math.tanh %274 : vector<2x32xf32>
    %cst_77 = arith.constant 1.000000e+00 : f32
    %276 = vector.broadcast %cst_77 : f32 to vector<2x32xf32>
    %277 = arith.subf %276, %270 : vector<2x32xf32>
    %278 = arith.mulf %277, %275 : vector<2x32xf32>
    %279 = arith.mulf %270, %248 : vector<2x32xf32>
    %280 = arith.addf %278, %279 : vector<2x32xf32>
    %c12_78 = arith.constant 12 : index
    %c0_79 = arith.constant 0 : index
    %281 = vector.load %arg1[%c12_78, %c0_79] : memref<16x1xf32, #tpu.memory_space<vmem>>, vector<2x1xf32>
    %282 = vector.broadcast %281 : vector<2x1xf32> to vector<2x32xf32>
    %283 = arith.mulf %282, %280 : vector<2x32xf32>
    %cst_80 = arith.constant 1.000000e+00 : f32
    %284 = vector.broadcast %cst_80 : f32 to vector<2x1xf32>
    %285 = arith.subf %284, %281 : vector<2x1xf32>
    %286 = vector.broadcast %285 : vector<2x1xf32> to vector<2x32xf32>
    %287 = arith.mulf %286, %248 : vector<2x32xf32>
    %288 = arith.addf %283, %287 : vector<2x32xf32>
    %c12_81 = arith.constant 12 : index
    %c0_82 = arith.constant 0 : index
    %289 = vector.load %arg14[%c12_81, %c0_82] : memref<16x32xf32, #tpu.memory_space<vmem>>, vector<2x32xf32>
    tpu.vector_store %arg14[%c12_81, %c0_82], %288 {strides = array<i32>} : memref<16x32xf32, #tpu.memory_space<vmem>>, vector<2x32xf32>,
    %c14 = arith.constant 14 : index
    %c0_83 = arith.constant 0 : index
    %290 = vector.load %arg13[%c14, %c0_83] : memref<16x128xf32, #tpu.memory_space<vmem>>, vector<2x128xf32>
    %291 = arith.truncf %288 : vector<2x32xf32> to vector<2x32xbf16>
    %cst_84 = arith.constant dense<0.000000e+00> : vector<2x128xf32>
    %292 = tpu.matmul %291, %7, %cst_84 {dimension_numbers = #tpu.dot_dimension_numbers<[1], [0], [0], [1], [0, 0, 1, 1], [], []>} : vector<2x32xbf16>, vector<32x128xbf16>, vector<2x128xf32> -> vector<2x128xf32>
    %293 = vector.broadcast %8 : vector<1x128xf32> to vector<2x128xf32>
    %294 = arith.addf %292, %293 : vector<2x128xf32>
    %295 = vector.extract_strided_slice %290 {offsets = [0, 0], sizes = [2, 32], strides = [1, 1]} : vector<2x128xf32> to vector<2x32xf32>
    %296 = vector.extract_strided_slice %294 {offsets = [0, 0], sizes = [2, 32], strides = [1, 1]} : vector<2x128xf32> to vector<2x32xf32>
    %297 = arith.addf %295, %296 : vector<2x32xf32>
    %298 = arith.negf %297 : vector<2x32xf32>
    %299 = math.exp %298 : vector<2x32xf32>
    %cst_85 = arith.constant 1.000000e+00 : f32
    %300 = vector.broadcast %cst_85 : f32 to vector<2x32xf32>
    %301 = arith.addf %300, %299 : vector<2x32xf32>
    %302 = arith.divf %300, %301 : vector<2x32xf32>
    %303 = vector.extract_strided_slice %290 {offsets = [0, 32], sizes = [2, 32], strides = [1, 1]} : vector<2x128xf32> to vector<2x32xf32>
    %304 = vector.extract_strided_slice %294 {offsets = [0, 32], sizes = [2, 32], strides = [1, 1]} : vector<2x128xf32> to vector<2x32xf32>
    %305 = arith.addf %303, %304 : vector<2x32xf32>
    %306 = arith.negf %305 : vector<2x32xf32>
    %307 = math.exp %306 : vector<2x32xf32>
    %cst_86 = arith.constant 1.000000e+00 : f32
    %308 = vector.broadcast %cst_86 : f32 to vector<2x32xf32>
    %309 = arith.addf %308, %307 : vector<2x32xf32>
    %310 = arith.divf %308, %309 : vector<2x32xf32>
    %311 = vector.extract_strided_slice %290 {offsets = [0, 64], sizes = [2, 32], strides = [1, 1]} : vector<2x128xf32> to vector<2x32xf32>
    %312 = vector.extract_strided_slice %294 {offsets = [0, 64], sizes = [2, 32], strides = [1, 1]} : vector<2x128xf32> to vector<2x32xf32>
    %313 = arith.mulf %302, %312 : vector<2x32xf32>
    %314 = arith.addf %311, %313 : vector<2x32xf32>
    %315 = math.tanh %314 : vector<2x32xf32>
    %cst_87 = arith.constant 1.000000e+00 : f32
    %316 = vector.broadcast %cst_87 : f32 to vector<2x32xf32>
    %317 = arith.subf %316, %310 : vector<2x32xf32>
    %318 = arith.mulf %317, %315 : vector<2x32xf32>
    %319 = arith.mulf %310, %288 : vector<2x32xf32>
    %320 = arith.addf %318, %319 : vector<2x32xf32>
    %c14_88 = arith.constant 14 : index
    %c0_89 = arith.constant 0 : index
    %321 = vector.load %arg1[%c14_88, %c0_89] : memref<16x1xf32, #tpu.memory_space<vmem>>, vector<2x1xf32>
    %322 = vector.broadcast %321 : vector<2x1xf32> to vector<2x32xf32>
    %323 = arith.mulf %322, %320 : vector<2x32xf32>
    %cst_90 = arith.constant 1.000000e+00 : f32
    %324 = vector.broadcast %cst_90 : f32 to vector<2x1xf32>
    %325 = arith.subf %324, %321 : vector<2x1xf32>
    %326 = vector.broadcast %325 : vector<2x1xf32> to vector<2x32xf32>
    %327 = arith.mulf %326, %288 : vector<2x32xf32>
    %328 = arith.addf %323, %327 : vector<2x32xf32>
    %c14_91 = arith.constant 14 : index
    %c0_92 = arith.constant 0 : index
    %329 = vector.load %arg14[%c14_91, %c0_92] : memref<16x32xf32, #tpu.memory_space<vmem>>, vector<2x32xf32>
    tpu.vector_store %arg14[%c14_91, %c0_92], %328 {strides = array<i32>} : memref<16x32xf32, #tpu.memory_space<vmem>>, vector<2x32xf32>,
    %c0_93 = arith.constant 0 : index
    %c0_94 = arith.constant 0 : index
    %330 = vector.load %arg14[%c0_93, %c0_94] : memref<16x32xf32, #tpu.memory_space<vmem>>, vector<16x32xf32>
    %331 = arith.truncf %330 : vector<16x32xf32> to vector<16x32xbf16>
    %c0_95 = arith.constant 0 : index
    %c0_96 = arith.constant 0 : index
    %332 = vector.load %arg6[%c0_95, %c0_96] : memref<32x128xbf16, #tpu.memory_space<vmem>>, vector<32x128xbf16>
    %cst_97 = arith.constant dense<0.000000e+00> : vector<16x128xf32>
    %333 = tpu.matmul %331, %332, %cst_97 {dimension_numbers = #tpu.dot_dimension_numbers<[1], [0], [0], [1], [0, 0, 1, 1], [], []>} : vector<16x32xbf16>, vector<32x128xbf16>, vector<16x128xf32> -> vector<16x128xf32>
    %c0_98 = arith.constant 0 : index
    %c0_99 = arith.constant 0 : index
    %334 = vector.load %arg8[%c0_98, %c0_99] : memref<1x128xf32, #tpu.memory_space<vmem>>, vector<1x128xf32>
    %335 = vector.broadcast %334 : vector<1x128xf32> to vector<16x128xf32>
    %336 = arith.addf %333, %335 : vector<16x128xf32>
    %c0_100 = arith.constant 0 : index
    %c0_101 = arith.constant 0 : index
    %337 = vector.load %arg13[%c0_100, %c0_101] : memref<16x128xf32, #tpu.memory_space<vmem>>, vector<16x128xf32>
    tpu.vector_store %arg13[%c0_100, %c0_101], %336 {strides = array<i32>} : memref<16x128xf32, #tpu.memory_space<vmem>>, vector<16x128xf32>,
    %c0_102 = arith.constant 0 : index
    %c0_103 = arith.constant 0 : index
    %338 = vector.load %arg7[%c0_102, %c0_103] : memref<32x128xbf16, #tpu.memory_space<vmem>>, vector<32x128xbf16>
    %c0_104 = arith.constant 0 : index
    %c0_105 = arith.constant 0 : index
    %339 = vector.load %arg9[%c0_104, %c0_105] : memref<1x128xf32, #tpu.memory_space<vmem>>, vector<1x128xf32>
    %cst_106 = arith.constant 0.000000e+00 : f32
    %340 = vector.broadcast %cst_106 : f32 to vector<2x32xf32>
    %c0_107 = arith.constant 0 : index
    %c0_108 = arith.constant 0 : index
    %341 = vector.load %arg13[%c0_107, %c0_108] : memref<16x128xf32, #tpu.memory_space<vmem>>, vector<2x128xf32>
    %342 = arith.truncf %340 : vector<2x32xf32> to vector<2x32xbf16>
    %cst_109 = arith.constant dense<0.000000e+00> : vector<2x128xf32>
    %343 = tpu.matmul %342, %338, %cst_109 {dimension_numbers = #tpu.dot_dimension_numbers<[1], [0], [0], [1], [0, 0, 1, 1], [], []>} : vector<2x32xbf16>, vector<32x128xbf16>, vector<2x128xf32> -> vector<2x128xf32>
    %344 = vector.broadcast %339 : vector<1x128xf32> to vector<2x128xf32>
    %345 = arith.addf %343, %344 : vector<2x128xf32>
    %346 = vector.extract_strided_slice %341 {offsets = [0, 0], sizes = [2, 32], strides = [1, 1]} : vector<2x128xf32> to vector<2x32xf32>
    %347 = vector.extract_strided_slice %345 {offsets = [0, 0], sizes = [2, 32], strides = [1, 1]} : vector<2x128xf32> to vector<2x32xf32>
    %348 = arith.addf %346, %347 : vector<2x32xf32>
    %349 = arith.negf %348 : vector<2x32xf32>
    %350 = math.exp %349 : vector<2x32xf32>
    %cst_110 = arith.constant 1.000000e+00 : f32
    %351 = vector.broadcast %cst_110 : f32 to vector<2x32xf32>
    %352 = arith.addf %351, %350 : vector<2x32xf32>
    %353 = arith.divf %351, %352 : vector<2x32xf32>
    %354 = vector.extract_strided_slice %341 {offsets = [0, 32], sizes = [2, 32], strides = [1, 1]} : vector<2x128xf32> to vector<2x32xf32>
    %355 = vector.extract_strided_slice %345 {offsets = [0, 32], sizes = [2, 32], strides = [1, 1]} : vector<2x128xf32> to vector<2x32xf32>
    %356 = arith.addf %354, %355 : vector<2x32xf32>
    %357 = arith.negf %356 : vector<2x32xf32>
    %358 = math.exp %357 : vector<2x32xf32>
    %cst_111 = arith.constant 1.000000e+00 : f32
    %359 = vector.broadcast %cst_111 : f32 to vector<2x32xf32>
    %360 = arith.addf %359, %358 : vector<2x32xf32>
    %361 = arith.divf %359, %360 : vector<2x32xf32>
    %362 = vector.extract_strided_slice %341 {offsets = [0, 64], sizes = [2, 32], strides = [1, 1]} : vector<2x128xf32> to vector<2x32xf32>
    %363 = vector.extract_strided_slice %345 {offsets = [0, 64], sizes = [2, 32], strides = [1, 1]} : vector<2x128xf32> to vector<2x32xf32>
    %364 = arith.mulf %353, %363 : vector<2x32xf32>
    %365 = arith.addf %362, %364 : vector<2x32xf32>
    %366 = math.tanh %365 : vector<2x32xf32>
    %cst_112 = arith.constant 1.000000e+00 : f32
    %367 = vector.broadcast %cst_112 : f32 to vector<2x32xf32>
    %368 = arith.subf %367, %361 : vector<2x32xf32>
    %369 = arith.mulf %368, %366 : vector<2x32xf32>
    %370 = arith.mulf %361, %340 : vector<2x32xf32>
    %371 = arith.addf %369, %370 : vector<2x32xf32>
    %c0_113 = arith.constant 0 : index
    %c0_114 = arith.constant 0 : index
    %372 = vector.load %arg1[%c0_113, %c0_114] : memref<16x1xf32, #tpu.memory_space<vmem>>, vector<2x1xf32>
    %373 = vector.broadcast %372 : vector<2x1xf32> to vector<2x32xf32>
    %374 = arith.mulf %373, %371 : vector<2x32xf32>
    %cst_115 = arith.constant 1.000000e+00 : f32
    %375 = vector.broadcast %cst_115 : f32 to vector<2x1xf32>
    %376 = arith.subf %375, %372 : vector<2x1xf32>
    %377 = vector.broadcast %376 : vector<2x1xf32> to vector<2x32xf32>
    %378 = arith.mulf %377, %340 : vector<2x32xf32>
    %379 = arith.addf %374, %378 : vector<2x32xf32>
    %c2_116 = arith.constant 2 : index
    %c0_117 = arith.constant 0 : index
    %380 = vector.load %arg13[%c2_116, %c0_117] : memref<16x128xf32, #tpu.memory_space<vmem>>, vector<2x128xf32>
    %381 = arith.truncf %379 : vector<2x32xf32> to vector<2x32xbf16>
    %cst_118 = arith.constant dense<0.000000e+00> : vector<2x128xf32>
    %382 = tpu.matmul %381, %338, %cst_118 {dimension_numbers = #tpu.dot_dimension_numbers<[1], [0], [0], [1], [0, 0, 1, 1], [], []>} : vector<2x32xbf16>, vector<32x128xbf16>, vector<2x128xf32> -> vector<2x128xf32>
    %383 = vector.broadcast %339 : vector<1x128xf32> to vector<2x128xf32>
    %384 = arith.addf %382, %383 : vector<2x128xf32>
    %385 = vector.extract_strided_slice %380 {offsets = [0, 0], sizes = [2, 32], strides = [1, 1]} : vector<2x128xf32> to vector<2x32xf32>
    %386 = vector.extract_strided_slice %384 {offsets = [0, 0], sizes = [2, 32], strides = [1, 1]} : vector<2x128xf32> to vector<2x32xf32>
    %387 = arith.addf %385, %386 : vector<2x32xf32>
    %388 = arith.negf %387 : vector<2x32xf32>
    %389 = math.exp %388 : vector<2x32xf32>
    %cst_119 = arith.constant 1.000000e+00 : f32
    %390 = vector.broadcast %cst_119 : f32 to vector<2x32xf32>
    %391 = arith.addf %390, %389 : vector<2x32xf32>
    %392 = arith.divf %390, %391 : vector<2x32xf32>
    %393 = vector.extract_strided_slice %380 {offsets = [0, 32], sizes = [2, 32], strides = [1, 1]} : vector<2x128xf32> to vector<2x32xf32>
    %394 = vector.extract_strided_slice %384 {offsets = [0, 32], sizes = [2, 32], strides = [1, 1]} : vector<2x128xf32> to vector<2x32xf32>
    %395 = arith.addf %393, %394 : vector<2x32xf32>
    %396 = arith.negf %395 : vector<2x32xf32>
    %397 = math.exp %396 : vector<2x32xf32>
    %cst_120 = arith.constant 1.000000e+00 : f32
    %398 = vector.broadcast %cst_120 : f32 to vector<2x32xf32>
    %399 = arith.addf %398, %397 : vector<2x32xf32>
    %400 = arith.divf %398, %399 : vector<2x32xf32>
    %401 = vector.extract_strided_slice %380 {offsets = [0, 64], sizes = [2, 32], strides = [1, 1]} : vector<2x128xf32> to vector<2x32xf32>
    %402 = vector.extract_strided_slice %384 {offsets = [0, 64], sizes = [2, 32], strides = [1, 1]} : vector<2x128xf32> to vector<2x32xf32>
    %403 = arith.mulf %392, %402 : vector<2x32xf32>
    %404 = arith.addf %401, %403 : vector<2x32xf32>
    %405 = math.tanh %404 : vector<2x32xf32>
    %cst_121 = arith.constant 1.000000e+00 : f32
    %406 = vector.broadcast %cst_121 : f32 to vector<2x32xf32>
    %407 = arith.subf %406, %400 : vector<2x32xf32>
    %408 = arith.mulf %407, %405 : vector<2x32xf32>
    %409 = arith.mulf %400, %379 : vector<2x32xf32>
    %410 = arith.addf %408, %409 : vector<2x32xf32>
    %c2_122 = arith.constant 2 : index
    %c0_123 = arith.constant 0 : index
    %411 = vector.load %arg1[%c2_122, %c0_123] : memref<16x1xf32, #tpu.memory_space<vmem>>, vector<2x1xf32>
    %412 = vector.broadcast %411 : vector<2x1xf32> to vector<2x32xf32>
    %413 = arith.mulf %412, %410 : vector<2x32xf32>
    %cst_124 = arith.constant 1.000000e+00 : f32
    %414 = vector.broadcast %cst_124 : f32 to vector<2x1xf32>
    %415 = arith.subf %414, %411 : vector<2x1xf32>
    %416 = vector.broadcast %415 : vector<2x1xf32> to vector<2x32xf32>
    %417 = arith.mulf %416, %379 : vector<2x32xf32>
    %418 = arith.addf %413, %417 : vector<2x32xf32>
    %c4_125 = arith.constant 4 : index
    %c0_126 = arith.constant 0 : index
    %419 = vector.load %arg13[%c4_125, %c0_126] : memref<16x128xf32, #tpu.memory_space<vmem>>, vector<2x128xf32>
    %420 = arith.truncf %418 : vector<2x32xf32> to vector<2x32xbf16>
    %cst_127 = arith.constant dense<0.000000e+00> : vector<2x128xf32>
    %421 = tpu.matmul %420, %338, %cst_127 {dimension_numbers = #tpu.dot_dimension_numbers<[1], [0], [0], [1], [0, 0, 1, 1], [], []>} : vector<2x32xbf16>, vector<32x128xbf16>, vector<2x128xf32> -> vector<2x128xf32>
    %422 = vector.broadcast %339 : vector<1x128xf32> to vector<2x128xf32>
    %423 = arith.addf %421, %422 : vector<2x128xf32>
    %424 = vector.extract_strided_slice %419 {offsets = [0, 0], sizes = [2, 32], strides = [1, 1]} : vector<2x128xf32> to vector<2x32xf32>
    %425 = vector.extract_strided_slice %423 {offsets = [0, 0], sizes = [2, 32], strides = [1, 1]} : vector<2x128xf32> to vector<2x32xf32>
    %426 = arith.addf %424, %425 : vector<2x32xf32>
    %427 = arith.negf %426 : vector<2x32xf32>
    %428 = math.exp %427 : vector<2x32xf32>
    %cst_128 = arith.constant 1.000000e+00 : f32
    %429 = vector.broadcast %cst_128 : f32 to vector<2x32xf32>
    %430 = arith.addf %429, %428 : vector<2x32xf32>
    %431 = arith.divf %429, %430 : vector<2x32xf32>
    %432 = vector.extract_strided_slice %419 {offsets = [0, 32], sizes = [2, 32], strides = [1, 1]} : vector<2x128xf32> to vector<2x32xf32>
    %433 = vector.extract_strided_slice %423 {offsets = [0, 32], sizes = [2, 32], strides = [1, 1]} : vector<2x128xf32> to vector<2x32xf32>
    %434 = arith.addf %432, %433 : vector<2x32xf32>
    %435 = arith.negf %434 : vector<2x32xf32>
    %436 = math.exp %435 : vector<2x32xf32>
    %cst_129 = arith.constant 1.000000e+00 : f32
    %437 = vector.broadcast %cst_129 : f32 to vector<2x32xf32>
    %438 = arith.addf %437, %436 : vector<2x32xf32>
    %439 = arith.divf %437, %438 : vector<2x32xf32>
    %440 = vector.extract_strided_slice %419 {offsets = [0, 64], sizes = [2, 32], strides = [1, 1]} : vector<2x128xf32> to vector<2x32xf32>
    %441 = vector.extract_strided_slice %423 {offsets = [0, 64], sizes = [2, 32], strides = [1, 1]} : vector<2x128xf32> to vector<2x32xf32>
    %442 = arith.mulf %431, %441 : vector<2x32xf32>
    %443 = arith.addf %440, %442 : vector<2x32xf32>
    %444 = math.tanh %443 : vector<2x32xf32>
    %cst_130 = arith.constant 1.000000e+00 : f32
    %445 = vector.broadcast %cst_130 : f32 to vector<2x32xf32>
    %446 = arith.subf %445, %439 : vector<2x32xf32>
    %447 = arith.mulf %446, %444 : vector<2x32xf32>
    %448 = arith.mulf %439, %418 : vector<2x32xf32>
    %449 = arith.addf %447, %448 : vector<2x32xf32>
    %c4_131 = arith.constant 4 : index
    %c0_132 = arith.constant 0 : index
    %450 = vector.load %arg1[%c4_131, %c0_132] : memref<16x1xf32, #tpu.memory_space<vmem>>, vector<2x1xf32>
    %451 = vector.broadcast %450 : vector<2x1xf32> to vector<2x32xf32>
    %452 = arith.mulf %451, %449 : vector<2x32xf32>
    %cst_133 = arith.constant 1.000000e+00 : f32
    %453 = vector.broadcast %cst_133 : f32 to vector<2x1xf32>
    %454 = arith.subf %453, %450 : vector<2x1xf32>
    %455 = vector.broadcast %454 : vector<2x1xf32> to vector<2x32xf32>
    %456 = arith.mulf %455, %418 : vector<2x32xf32>
    %457 = arith.addf %452, %456 : vector<2x32xf32>
    %c6_134 = arith.constant 6 : index
    %c0_135 = arith.constant 0 : index
    %458 = vector.load %arg13[%c6_134, %c0_135] : memref<16x128xf32, #tpu.memory_space<vmem>>, vector<2x128xf32>
    %459 = arith.truncf %457 : vector<2x32xf32> to vector<2x32xbf16>
    %cst_136 = arith.constant dense<0.000000e+00> : vector<2x128xf32>
    %460 = tpu.matmul %459, %338, %cst_136 {dimension_numbers = #tpu.dot_dimension_numbers<[1], [0], [0], [1], [0, 0, 1, 1], [], []>} : vector<2x32xbf16>, vector<32x128xbf16>, vector<2x128xf32> -> vector<2x128xf32>
    %461 = vector.broadcast %339 : vector<1x128xf32> to vector<2x128xf32>
    %462 = arith.addf %460, %461 : vector<2x128xf32>
    %463 = vector.extract_strided_slice %458 {offsets = [0, 0], sizes = [2, 32], strides = [1, 1]} : vector<2x128xf32> to vector<2x32xf32>
    %464 = vector.extract_strided_slice %462 {offsets = [0, 0], sizes = [2, 32], strides = [1, 1]} : vector<2x128xf32> to vector<2x32xf32>
    %465 = arith.addf %463, %464 : vector<2x32xf32>
    %466 = arith.negf %465 : vector<2x32xf32>
    %467 = math.exp %466 : vector<2x32xf32>
    %cst_137 = arith.constant 1.000000e+00 : f32
    %468 = vector.broadcast %cst_137 : f32 to vector<2x32xf32>
    %469 = arith.addf %468, %467 : vector<2x32xf32>
    %470 = arith.divf %468, %469 : vector<2x32xf32>
    %471 = vector.extract_strided_slice %458 {offsets = [0, 32], sizes = [2, 32], strides = [1, 1]} : vector<2x128xf32> to vector<2x32xf32>
    %472 = vector.extract_strided_slice %462 {offsets = [0, 32], sizes = [2, 32], strides = [1, 1]} : vector<2x128xf32> to vector<2x32xf32>
    %473 = arith.addf %471, %472 : vector<2x32xf32>
    %474 = arith.negf %473 : vector<2x32xf32>
    %475 = math.exp %474 : vector<2x32xf32>
    %cst_138 = arith.constant 1.000000e+00 : f32
    %476 = vector.broadcast %cst_138 : f32 to vector<2x32xf32>
    %477 = arith.addf %476, %475 : vector<2x32xf32>
    %478 = arith.divf %476, %477 : vector<2x32xf32>
    %479 = vector.extract_strided_slice %458 {offsets = [0, 64], sizes = [2, 32], strides = [1, 1]} : vector<2x128xf32> to vector<2x32xf32>
    %480 = vector.extract_strided_slice %462 {offsets = [0, 64], sizes = [2, 32], strides = [1, 1]} : vector<2x128xf32> to vector<2x32xf32>
    %481 = arith.mulf %470, %480 : vector<2x32xf32>
    %482 = arith.addf %479, %481 : vector<2x32xf32>
    %483 = math.tanh %482 : vector<2x32xf32>
    %cst_139 = arith.constant 1.000000e+00 : f32
    %484 = vector.broadcast %cst_139 : f32 to vector<2x32xf32>
    %485 = arith.subf %484, %478 : vector<2x32xf32>
    %486 = arith.mulf %485, %483 : vector<2x32xf32>
    %487 = arith.mulf %478, %457 : vector<2x32xf32>
    %488 = arith.addf %486, %487 : vector<2x32xf32>
    %c6_140 = arith.constant 6 : index
    %c0_141 = arith.constant 0 : index
    %489 = vector.load %arg1[%c6_140, %c0_141] : memref<16x1xf32, #tpu.memory_space<vmem>>, vector<2x1xf32>
    %490 = vector.broadcast %489 : vector<2x1xf32> to vector<2x32xf32>
    %491 = arith.mulf %490, %488 : vector<2x32xf32>
    %cst_142 = arith.constant 1.000000e+00 : f32
    %492 = vector.broadcast %cst_142 : f32 to vector<2x1xf32>
    %493 = arith.subf %492, %489 : vector<2x1xf32>
    %494 = vector.broadcast %493 : vector<2x1xf32> to vector<2x32xf32>
    %495 = arith.mulf %494, %457 : vector<2x32xf32>
    %496 = arith.addf %491, %495 : vector<2x32xf32>
    %c8_143 = arith.constant 8 : index
    %c0_144 = arith.constant 0 : index
    %497 = vector.load %arg13[%c8_143, %c0_144] : memref<16x128xf32, #tpu.memory_space<vmem>>, vector<2x128xf32>
    %498 = arith.truncf %496 : vector<2x32xf32> to vector<2x32xbf16>
    %cst_145 = arith.constant dense<0.000000e+00> : vector<2x128xf32>
    %499 = tpu.matmul %498, %338, %cst_145 {dimension_numbers = #tpu.dot_dimension_numbers<[1], [0], [0], [1], [0, 0, 1, 1], [], []>} : vector<2x32xbf16>, vector<32x128xbf16>, vector<2x128xf32> -> vector<2x128xf32>
    %500 = vector.broadcast %339 : vector<1x128xf32> to vector<2x128xf32>
    %501 = arith.addf %499, %500 : vector<2x128xf32>
    %502 = vector.extract_strided_slice %497 {offsets = [0, 0], sizes = [2, 32], strides = [1, 1]} : vector<2x128xf32> to vector<2x32xf32>
    %503 = vector.extract_strided_slice %501 {offsets = [0, 0], sizes = [2, 32], strides = [1, 1]} : vector<2x128xf32> to vector<2x32xf32>
    %504 = arith.addf %502, %503 : vector<2x32xf32>
    %505 = arith.negf %504 : vector<2x32xf32>
    %506 = math.exp %505 : vector<2x32xf32>
    %cst_146 = arith.constant 1.000000e+00 : f32
    %507 = vector.broadcast %cst_146 : f32 to vector<2x32xf32>
    %508 = arith.addf %507, %506 : vector<2x32xf32>
    %509 = arith.divf %507, %508 : vector<2x32xf32>
    %510 = vector.extract_strided_slice %497 {offsets = [0, 32], sizes = [2, 32], strides = [1, 1]} : vector<2x128xf32> to vector<2x32xf32>
    %511 = vector.extract_strided_slice %501 {offsets = [0, 32], sizes = [2, 32], strides = [1, 1]} : vector<2x128xf32> to vector<2x32xf32>
    %512 = arith.addf %510, %511 : vector<2x32xf32>
    %513 = arith.negf %512 : vector<2x32xf32>
    %514 = math.exp %513 : vector<2x32xf32>
    %cst_147 = arith.constant 1.000000e+00 : f32
    %515 = vector.broadcast %cst_147 : f32 to vector<2x32xf32>
    %516 = arith.addf %515, %514 : vector<2x32xf32>
    %517 = arith.divf %515, %516 : vector<2x32xf32>
    %518 = vector.extract_strided_slice %497 {offsets = [0, 64], sizes = [2, 32], strides = [1, 1]} : vector<2x128xf32> to vector<2x32xf32>
    %519 = vector.extract_strided_slice %501 {offsets = [0, 64], sizes = [2, 32], strides = [1, 1]} : vector<2x128xf32> to vector<2x32xf32>
    %520 = arith.mulf %509, %519 : vector<2x32xf32>
    %521 = arith.addf %518, %520 : vector<2x32xf32>
    %522 = math.tanh %521 : vector<2x32xf32>
    %cst_148 = arith.constant 1.000000e+00 : f32
    %523 = vector.broadcast %cst_148 : f32 to vector<2x32xf32>
    %524 = arith.subf %523, %517 : vector<2x32xf32>
    %525 = arith.mulf %524, %522 : vector<2x32xf32>
    %526 = arith.mulf %517, %496 : vector<2x32xf32>
    %527 = arith.addf %525, %526 : vector<2x32xf32>
    %c8_149 = arith.constant 8 : index
    %c0_150 = arith.constant 0 : index
    %528 = vector.load %arg1[%c8_149, %c0_150] : memref<16x1xf32, #tpu.memory_space<vmem>>, vector<2x1xf32>
    %529 = vector.broadcast %528 : vector<2x1xf32> to vector<2x32xf32>
    %530 = arith.mulf %529, %527 : vector<2x32xf32>
    %cst_151 = arith.constant 1.000000e+00 : f32
    %531 = vector.broadcast %cst_151 : f32 to vector<2x1xf32>
    %532 = arith.subf %531, %528 : vector<2x1xf32>
    %533 = vector.broadcast %532 : vector<2x1xf32> to vector<2x32xf32>
    %534 = arith.mulf %533, %496 : vector<2x32xf32>
    %535 = arith.addf %530, %534 : vector<2x32xf32>
    %c10_152 = arith.constant 10 : index
    %c0_153 = arith.constant 0 : index
    %536 = vector.load %arg13[%c10_152, %c0_153] : memref<16x128xf32, #tpu.memory_space<vmem>>, vector<2x128xf32>
    %537 = arith.truncf %535 : vector<2x32xf32> to vector<2x32xbf16>
    %cst_154 = arith.constant dense<0.000000e+00> : vector<2x128xf32>
    %538 = tpu.matmul %537, %338, %cst_154 {dimension_numbers = #tpu.dot_dimension_numbers<[1], [0], [0], [1], [0, 0, 1, 1], [], []>} : vector<2x32xbf16>, vector<32x128xbf16>, vector<2x128xf32> -> vector<2x128xf32>
    %539 = vector.broadcast %339 : vector<1x128xf32> to vector<2x128xf32>
    %540 = arith.addf %538, %539 : vector<2x128xf32>
    %541 = vector.extract_strided_slice %536 {offsets = [0, 0], sizes = [2, 32], strides = [1, 1]} : vector<2x128xf32> to vector<2x32xf32>
    %542 = vector.extract_strided_slice %540 {offsets = [0, 0], sizes = [2, 32], strides = [1, 1]} : vector<2x128xf32> to vector<2x32xf32>
    %543 = arith.addf %541, %542 : vector<2x32xf32>
    %544 = arith.negf %543 : vector<2x32xf32>
    %545 = math.exp %544 : vector<2x32xf32>
    %cst_155 = arith.constant 1.000000e+00 : f32
    %546 = vector.broadcast %cst_155 : f32 to vector<2x32xf32>
    %547 = arith.addf %546, %545 : vector<2x32xf32>
    %548 = arith.divf %546, %547 : vector<2x32xf32>
    %549 = vector.extract_strided_slice %536 {offsets = [0, 32], sizes = [2, 32], strides = [1, 1]} : vector<2x128xf32> to vector<2x32xf32>
    %550 = vector.extract_strided_slice %540 {offsets = [0, 32], sizes = [2, 32], strides = [1, 1]} : vector<2x128xf32> to vector<2x32xf32>
    %551 = arith.addf %549, %550 : vector<2x32xf32>
    %552 = arith.negf %551 : vector<2x32xf32>
    %553 = math.exp %552 : vector<2x32xf32>
    %cst_156 = arith.constant 1.000000e+00 : f32
    %554 = vector.broadcast %cst_156 : f32 to vector<2x32xf32>
    %555 = arith.addf %554, %553 : vector<2x32xf32>
    %556 = arith.divf %554, %555 : vector<2x32xf32>
    %557 = vector.extract_strided_slice %536 {offsets = [0, 64], sizes = [2, 32], strides = [1, 1]} : vector<2x128xf32> to vector<2x32xf32>
    %558 = vector.extract_strided_slice %540 {offsets = [0, 64], sizes = [2, 32], strides = [1, 1]} : vector<2x128xf32> to vector<2x32xf32>
    %559 = arith.mulf %548, %558 : vector<2x32xf32>
    %560 = arith.addf %557, %559 : vector<2x32xf32>
    %561 = math.tanh %560 : vector<2x32xf32>
    %cst_157 = arith.constant 1.000000e+00 : f32
    %562 = vector.broadcast %cst_157 : f32 to vector<2x32xf32>
    %563 = arith.subf %562, %556 : vector<2x32xf32>
    %564 = arith.mulf %563, %561 : vector<2x32xf32>
    %565 = arith.mulf %556, %535 : vector<2x32xf32>
    %566 = arith.addf %564, %565 : vector<2x32xf32>
    %c10_158 = arith.constant 10 : index
    %c0_159 = arith.constant 0 : index
    %567 = vector.load %arg1[%c10_158, %c0_159] : memref<16x1xf32, #tpu.memory_space<vmem>>, vector<2x1xf32>
    %568 = vector.broadcast %567 : vector<2x1xf32> to vector<2x32xf32>
    %569 = arith.mulf %568, %566 : vector<2x32xf32>
    %cst_160 = arith.constant 1.000000e+00 : f32
    %570 = vector.broadcast %cst_160 : f32 to vector<2x1xf32>
    %571 = arith.subf %570, %567 : vector<2x1xf32>
    %572 = vector.broadcast %571 : vector<2x1xf32> to vector<2x32xf32>
    %573 = arith.mulf %572, %535 : vector<2x32xf32>
    %574 = arith.addf %569, %573 : vector<2x32xf32>
    %c12_161 = arith.constant 12 : index
    %c0_162 = arith.constant 0 : index
    %575 = vector.load %arg13[%c12_161, %c0_162] : memref<16x128xf32, #tpu.memory_space<vmem>>, vector<2x128xf32>
    %576 = arith.truncf %574 : vector<2x32xf32> to vector<2x32xbf16>
    %cst_163 = arith.constant dense<0.000000e+00> : vector<2x128xf32>
    %577 = tpu.matmul %576, %338, %cst_163 {dimension_numbers = #tpu.dot_dimension_numbers<[1], [0], [0], [1], [0, 0, 1, 1], [], []>} : vector<2x32xbf16>, vector<32x128xbf16>, vector<2x128xf32> -> vector<2x128xf32>
    %578 = vector.broadcast %339 : vector<1x128xf32> to vector<2x128xf32>
    %579 = arith.addf %577, %578 : vector<2x128xf32>
    %580 = vector.extract_strided_slice %575 {offsets = [0, 0], sizes = [2, 32], strides = [1, 1]} : vector<2x128xf32> to vector<2x32xf32>
    %581 = vector.extract_strided_slice %579 {offsets = [0, 0], sizes = [2, 32], strides = [1, 1]} : vector<2x128xf32> to vector<2x32xf32>
    %582 = arith.addf %580, %581 : vector<2x32xf32>
    %583 = arith.negf %582 : vector<2x32xf32>
    %584 = math.exp %583 : vector<2x32xf32>
    %cst_164 = arith.constant 1.000000e+00 : f32
    %585 = vector.broadcast %cst_164 : f32 to vector<2x32xf32>
    %586 = arith.addf %585, %584 : vector<2x32xf32>
    %587 = arith.divf %585, %586 : vector<2x32xf32>
    %588 = vector.extract_strided_slice %575 {offsets = [0, 32], sizes = [2, 32], strides = [1, 1]} : vector<2x128xf32> to vector<2x32xf32>
    %589 = vector.extract_strided_slice %579 {offsets = [0, 32], sizes = [2, 32], strides = [1, 1]} : vector<2x128xf32> to vector<2x32xf32>
    %590 = arith.addf %588, %589 : vector<2x32xf32>
    %591 = arith.negf %590 : vector<2x32xf32>
    %592 = math.exp %591 : vector<2x32xf32>
    %cst_165 = arith.constant 1.000000e+00 : f32
    %593 = vector.broadcast %cst_165 : f32 to vector<2x32xf32>
    %594 = arith.addf %593, %592 : vector<2x32xf32>
    %595 = arith.divf %593, %594 : vector<2x32xf32>
    %596 = vector.extract_strided_slice %575 {offsets = [0, 64], sizes = [2, 32], strides = [1, 1]} : vector<2x128xf32> to vector<2x32xf32>
    %597 = vector.extract_strided_slice %579 {offsets = [0, 64], sizes = [2, 32], strides = [1, 1]} : vector<2x128xf32> to vector<2x32xf32>
    %598 = arith.mulf %587, %597 : vector<2x32xf32>
    %599 = arith.addf %596, %598 : vector<2x32xf32>
    %600 = math.tanh %599 : vector<2x32xf32>
    %cst_166 = arith.constant 1.000000e+00 : f32
    %601 = vector.broadcast %cst_166 : f32 to vector<2x32xf32>
    %602 = arith.subf %601, %595 : vector<2x32xf32>
    %603 = arith.mulf %602, %600 : vector<2x32xf32>
    %604 = arith.mulf %595, %574 : vector<2x32xf32>
    %605 = arith.addf %603, %604 : vector<2x32xf32>
    %c12_167 = arith.constant 12 : index
    %c0_168 = arith.constant 0 : index
    %606 = vector.load %arg1[%c12_167, %c0_168] : memref<16x1xf32, #tpu.memory_space<vmem>>, vector<2x1xf32>
    %607 = vector.broadcast %606 : vector<2x1xf32> to vector<2x32xf32>
    %608 = arith.mulf %607, %605 : vector<2x32xf32>
    %cst_169 = arith.constant 1.000000e+00 : f32
    %609 = vector.broadcast %cst_169 : f32 to vector<2x1xf32>
    %610 = arith.subf %609, %606 : vector<2x1xf32>
    %611 = vector.broadcast %610 : vector<2x1xf32> to vector<2x32xf32>
    %612 = arith.mulf %611, %574 : vector<2x32xf32>
    %613 = arith.addf %608, %612 : vector<2x32xf32>
    %c14_170 = arith.constant 14 : index
    %c0_171 = arith.constant 0 : index
    %614 = vector.load %arg13[%c14_170, %c0_171] : memref<16x128xf32, #tpu.memory_space<vmem>>, vector<2x128xf32>
    %615 = arith.truncf %613 : vector<2x32xf32> to vector<2x32xbf16>
    %cst_172 = arith.constant dense<0.000000e+00> : vector<2x128xf32>
    %616 = tpu.matmul %615, %338, %cst_172 {dimension_numbers = #tpu.dot_dimension_numbers<[1], [0], [0], [1], [0, 0, 1, 1], [], []>} : vector<2x32xbf16>, vector<32x128xbf16>, vector<2x128xf32> -> vector<2x128xf32>
    %617 = vector.broadcast %339 : vector<1x128xf32> to vector<2x128xf32>
    %618 = arith.addf %616, %617 : vector<2x128xf32>
    %619 = vector.extract_strided_slice %614 {offsets = [0, 0], sizes = [2, 32], strides = [1, 1]} : vector<2x128xf32> to vector<2x32xf32>
    %620 = vector.extract_strided_slice %618 {offsets = [0, 0], sizes = [2, 32], strides = [1, 1]} : vector<2x128xf32> to vector<2x32xf32>
    %621 = arith.addf %619, %620 : vector<2x32xf32>
    %622 = arith.negf %621 : vector<2x32xf32>
    %623 = math.exp %622 : vector<2x32xf32>
    %cst_173 = arith.constant 1.000000e+00 : f32
    %624 = vector.broadcast %cst_173 : f32 to vector<2x32xf32>
    %625 = arith.addf %624, %623 : vector<2x32xf32>
    %626 = arith.divf %624, %625 : vector<2x32xf32>
    %627 = vector.extract_strided_slice %614 {offsets = [0, 32], sizes = [2, 32], strides = [1, 1]} : vector<2x128xf32> to vector<2x32xf32>
    %628 = vector.extract_strided_slice %618 {offsets = [0, 32], sizes = [2, 32], strides = [1, 1]} : vector<2x128xf32> to vector<2x32xf32>
    %629 = arith.addf %627, %628 : vector<2x32xf32>
    %630 = arith.negf %629 : vector<2x32xf32>
    %631 = math.exp %630 : vector<2x32xf32>
    %cst_174 = arith.constant 1.000000e+00 : f32
    %632 = vector.broadcast %cst_174 : f32 to vector<2x32xf32>
    %633 = arith.addf %632, %631 : vector<2x32xf32>
    %634 = arith.divf %632, %633 : vector<2x32xf32>
    %635 = vector.extract_strided_slice %614 {offsets = [0, 64], sizes = [2, 32], strides = [1, 1]} : vector<2x128xf32> to vector<2x32xf32>
    %636 = vector.extract_strided_slice %618 {offsets = [0, 64], sizes = [2, 32], strides = [1, 1]} : vector<2x128xf32> to vector<2x32xf32>
    %637 = arith.mulf %626, %636 : vector<2x32xf32>
    %638 = arith.addf %635, %637 : vector<2x32xf32>
    %639 = math.tanh %638 : vector<2x32xf32>
    %cst_175 = arith.constant 1.000000e+00 : f32
    %640 = vector.broadcast %cst_175 : f32 to vector<2x32xf32>
    %641 = arith.subf %640, %634 : vector<2x32xf32>
    %642 = arith.mulf %641, %639 : vector<2x32xf32>
    %643 = arith.mulf %634, %613 : vector<2x32xf32>
    %644 = arith.addf %642, %643 : vector<2x32xf32>
    %c14_176 = arith.constant 14 : index
    %c0_177 = arith.constant 0 : index
    %645 = vector.load %arg1[%c14_176, %c0_177] : memref<16x1xf32, #tpu.memory_space<vmem>>, vector<2x1xf32>
    %646 = vector.broadcast %645 : vector<2x1xf32> to vector<2x32xf32>
    %647 = arith.mulf %646, %644 : vector<2x32xf32>
    %cst_178 = arith.constant 1.000000e+00 : f32
    %648 = vector.broadcast %cst_178 : f32 to vector<2x1xf32>
    %649 = arith.subf %648, %645 : vector<2x1xf32>
    %650 = vector.broadcast %649 : vector<2x1xf32> to vector<2x32xf32>
    %651 = arith.mulf %650, %613 : vector<2x32xf32>
    %652 = arith.addf %647, %651 : vector<2x32xf32>
    %653 = arith.truncf %652 : vector<2x32xf32> to vector<2x32xbf16>
    %c0_179 = arith.constant 0 : index
    %c0_180 = arith.constant 0 : index
    %654 = vector.load %arg10[%c0_179, %c0_180] : memref<32x4xbf16, #tpu.memory_space<vmem>>, vector<32x4xbf16>
    %cst_181 = arith.constant dense<0.000000e+00> : vector<2x4xf32>
    %655 = tpu.matmul %653, %654, %cst_181 {dimension_numbers = #tpu.dot_dimension_numbers<[1], [0], [0], [1], [0, 0, 1, 1], [], []>} : vector<2x32xbf16>, vector<32x4xbf16>, vector<2x4xf32> -> vector<2x4xf32>
    %c0_182 = arith.constant 0 : index
    %c0_183 = arith.constant 0 : index
    %656 = vector.load %arg11[%c0_182, %c0_183] : memref<1x4xf32, #tpu.memory_space<vmem>>, vector<1x4xf32>
    %657 = vector.broadcast %656 : vector<1x4xf32> to vector<2x4xf32>
    %658 = arith.addf %655, %657 : vector<2x4xf32>
    %c0_184 = arith.constant 0 : index
    %c0_185 = arith.constant 0 : index
    %659 = vector.load %arg12[%c0_184, %c0_185] : memref<2x4xf32, #tpu.memory_space<vmem>>, vector<2x4xf32>
    tpu.vector_store %arg12[%c0_184, %c0_185], %658 {strides = array<i32>} : memref<2x4xf32, #tpu.memory_space<vmem>>, vector<2x4xf32>,
    return
  }
}

</mosaic_0001>

<llo_original>
// kernel: recurrent_network_forward.1
$region0: #{recurrent_network_forward.1}
  #allocation0 [shape = 'u32[]', space=smem, size = 0x4, offset = 0x4, fixed_abs, tag = 'smem constant byte address 0x4 - core index']
  #allocation1 [shape = 'u32[144,128]{1,0:T(1,128)}', space=vmem, size = 0x12000, scoped, tag = 'internal scratch']
  #allocation2 [shape = 'f32[16,128]{1,0:T(8,128)}', space=vmem, size = 0x2000, scoped, tag = 'scratch operand']
  #allocation3 [shape = 'f32[16,32]{1,0:T(8,128)}', space=vmem, size = 0x2000, scoped, tag = 'scratch operand']
  %s0 = inlined_call_operand.vmem [shape: bf16[16,16], index: 0, kind: input, shape index: {}]
  %s1 = inlined_call_operand.vmem [shape: f32[16,1], index: 1, kind: input, shape index: {}]
  %s2 = inlined_call_operand.vmem [shape: bf16[16,128], index: 2, kind: input, shape index: {}]
  %s3 = inlined_call_operand.vmem [shape: bf16[32,128], index: 3, kind: input, shape index: {}]
  %s4 = inlined_call_operand.vmem [shape: f32[1,128], index: 4, kind: input, shape index: {}]
  %s5 = inlined_call_operand.vmem [shape: f32[1,128], index: 5, kind: input, shape index: {}]
  %s6 = inlined_call_operand.vmem [shape: bf16[32,128], index: 6, kind: input, shape index: {}]
  %s7 = inlined_call_operand.vmem [shape: bf16[32,128], index: 7, kind: input, shape index: {}]
  %s8 = inlined_call_operand.vmem [shape: f32[1,128], index: 8, kind: input, shape index: {}]
  %s9 = inlined_call_operand.vmem [shape: f32[1,128], index: 9, kind: input, shape index: {}]
  %s10 = inlined_call_operand.vmem [shape: bf16[32,4], index: 10, kind: input, shape index: {}]
  %s11 = inlined_call_operand.vmem [shape: f32[1,4], index: 11, kind: input, shape index: {}]
  %s12 = inlined_call_operand.hbm [shape: f32[2,4], index: 12, kind: output, shape index: {}]
  %s13 = sld [smem:[#allocation0]]
  $region58: #{recurrent_network_forward.1} parent=0
    _
  %s15 = ssub.s32 1, %s13
  %s16 = scalar_select 0, %s15, %s13
  $region1: #{recurrent_network_forward.1} parent=0
    #allocation4 [shape = 'u8[1024]{0}', space=vmem, size = 0x400, scoped, tag = 'output window, operand 0, single buffered']
    #allocation5 [shape = 's32[1]{0}', space=sflag, size = 0x4, scoped, tag = 'scoped memory for recurrent_network_forward.1']
    %17 = vsyncpa [#allocation5], 0
    // Predicated region
    $region2: #{recurrent_network_forward.1} parent=1 // pred_check
      _
    $region3: #{recurrent_network_forward.1} parent=1 // pred_check_branch
      %19 = sbr.rel (0) target = $region5
    $region4: #{recurrent_network_forward.1} parent=1 // pred_region
      _
    $region5: #{recurrent_network_forward.1} parent=1 // pred_fallthru
      _
    // Predicated region
    $region6: #{recurrent_network_forward.1} parent=1 // pred_check
      _
    $region7: #{recurrent_network_forward.1} parent=1 // pred_check_branch
      %21 = sbr.rel (0) target = $region9
    $region8: #{recurrent_network_forward.1} parent=1 // pred_region
      _
    $region9: #{recurrent_network_forward.1} parent=1 // pred_fallthru
      _
    // Predicated region
    $region10: #{recurrent_network_forward.1} parent=1 // pred_check
      _
    $region11: #{recurrent_network_forward.1} parent=1 // pred_check_branch
      %23 = sbr.rel (0) target = $region13
    $region12: #{recurrent_network_forward.1} parent=1 // pred_region
      _
    $region13: #{recurrent_network_forward.1} parent=1 // pred_fallthru
      _
    // Predicated region
    $region14: #{recurrent_network_forward.1} parent=1 // pred_check
      _
    $region15: #{recurrent_network_forward.1} parent=1 // pred_check_branch
      %25 = sbr.rel (0) target = $region17
    $region16: #{recurrent_network_forward.1} parent=1 // pred_region
      _
    $region17: #{recurrent_network_forward.1} parent=1 // pred_fallthru
      _
    // Predicated region
    $region18: #{recurrent_network_forward.1} parent=1 // pred_check
      _
    $region19: #{recurrent_network_forward.1} parent=1 // pred_check_branch
      %27 = sbr.rel (0) target = $region21
    $region20: #{recurrent_network_forward.1} parent=1 // pred_region
      _
    $region21: #{recurrent_network_forward.1} parent=1 // pred_fallthru
      _
    // Predicated region
    $region22: #{recurrent_network_forward.1} parent=1 // pred_check
      _
    $region23: #{recurrent_network_forward.1} parent=1 // pred_check_branch
      %29 = sbr.rel (0) target = $region25
    $region24: #{recurrent_network_forward.1} parent=1 // pred_region
      _
    $region25: #{recurrent_network_forward.1} parent=1 // pred_fallthru
      _
    // Predicated region
    $region26: #{recurrent_network_forward.1} parent=1 // pred_check
      _
    $region27: #{recurrent_network_forward.1} parent=1 // pred_check_branch
      %31 = sbr.rel (0) target = $region29
    $region28: #{recurrent_network_forward.1} parent=1 // pred_region
      _
    $region29: #{recurrent_network_forward.1} parent=1 // pred_fallthru
      _
    // Predicated region
    $region30: #{recurrent_network_forward.1} parent=1 // pred_check
      _
    $region31: #{recurrent_network_forward.1} parent=1 // pred_check_branch
      %33 = sbr.rel (0) target = $region33
    $region32: #{recurrent_network_forward.1} parent=1 // pred_region
      _
    $region33: #{recurrent_network_forward.1} parent=1 // pred_fallthru
      _
    // Predicated region
    $region34: #{recurrent_network_forward.1} parent=1 // pred_check
      _
    $region35: #{recurrent_network_forward.1} parent=1 // pred_check_branch
      %35 = sbr.rel (0) target = $region37
    $region36: #{recurrent_network_forward.1} parent=1 // pred_region
      _
    $region37: #{recurrent_network_forward.1} parent=1 // pred_fallthru
      _
    // Predicated region
    $region38: #{recurrent_network_forward.1} parent=1 // pred_check
      _
    $region39: #{recurrent_network_forward.1} parent=1 // pred_check_branch
      %37 = sbr.rel (0) target = $region41
    $region40: #{recurrent_network_forward.1} parent=1 // pred_region
      _
    $region41: #{recurrent_network_forward.1} parent=1 // pred_fallthru
      _
    // Predicated region
    $region42: #{recurrent_network_forward.1} parent=1 // pred_check
      _
    $region43: #{recurrent_network_forward.1} parent=1 // pred_check_branch
      %39 = sbr.rel (0) target = $region45
    $region44: #{recurrent_network_forward.1} parent=1 // pred_region
      _
    $region45: #{recurrent_network_forward.1} parent=1 // pred_fallthru
      _
    // Predicated region
    $region46: #{recurrent_network_forward.1} parent=1 // pred_check
      _
    $region47: #{recurrent_network_forward.1} parent=1 // pred_check_branch
      %41 = sbr.rel (0) target = $region49
    $region48: #{recurrent_network_forward.1} parent=1 // pred_region
      _
    $region49: #{recurrent_network_forward.1} parent=1 // pred_fallthru
      _
    %v43 = vld [vmem:[%s0] sm:$0xf]
    %v44 = vld [vmem:[%s0 + $0x4] sm:$0xf]
    %v45 = vld [vmem:[%s2] sm:$0xf]
    %v46 = vld [vmem:[%s2 + $0x4] sm:$0xf]
    %v47 = vld [vmem:[%s4] sm:$0x1]
    %v49 = vlaneseq
    %v50 = vshrl.u32 %v49, 7
    %v51 = vsub.s32 0, %v50
    %v52 = vrot.slane %v47, %v51
    %v56 = vunpack.c.l.b16 %v43
    %v57 = vunpack.c.l.b16 %v44
    %v58 = vpack.c.b16 %v57, %v56
    %v61 = vunpack.c.l.b16 %v45
    %v62 = vunpack.c.l.b16 %v46
    %v63 = vpack.c.b16 %v62, %v61
    %vm65 = vcmask 130048
    %v67 = vsel %vm65, %v58, 0
    %69 = vmatprep.subr.bf16.mxu0 0
    %70 = vmatpush1.bf16.msra.mxu0 %v63
    %71 = vmatprep.subr.bf16.mxu0 0
    %72 = vmatpush1.bf16.msra.mxu0 0
    %73 = vmatprep.subr.bf16.mxu0 0
    %74 = vmatpush1.bf16.msra.mxu0 0
    %75 = vmatprep.subr.bf16.mxu0 0
    %76 = vmatpush1.bf16.msra.mxu0 0
    %77 = vmatprep.subr.bf16.mxu0 0
    %78 = vmatpush1.bf16.msra.mxu0 0
    %79 = vmatprep.subr.bf16.mxu0 0
    %80 = vmatpush1.bf16.msra.mxu0 0
    %81 = vmatprep.subr.bf16.mxu0 0
    %82 = vmatpush1.bf16.msra.mxu0 0
    %83 = vmatprep.subr.bf16.mxu0 0
    %84 = vmatpush1.bf16.msra.mxu0 0
    %85 = vmatprep.subr.bf16.mxu0 0
    %86 = vmatpush1.bf16.msra.mxu0 0
    %87 = vmatprep.subr.bf16.mxu0 0
    %88 = vmatpush1.bf16.msra.mxu0 0
    %89 = vmatprep.subr.bf16.mxu0 0
    %90 = vmatpush1.bf16.msra.mxu0 0
    %91 = vmatprep.subr.bf16.mxu0 0
    %92 = vmatpush1.bf16.msra.mxu0 0
    %93 = vmatprep.subr.bf16.mxu0 0
    %94 = vmatpush1.bf16.msra.mxu0 0
    %95 = vmatprep.subr.bf16.mxu0 0
    %96 = vmatpush1.bf16.msra.mxu0 0
    %97 = vmatprep.subr.bf16.mxu0 0
    %98 = vmatpush1.bf16.msra.mxu0 0
    %99 = vmatprep.subr.bf16.mxu0 0
    %100 = vmatpush1.bf16.msra.mxu0 0
    %101 = vmatprep.mubr.bf16.mxu0 0
    %102 = vmatmul.mubr.bf16.gmra.mrb[0].mxu0 %v67
    %v103 = vpop.f32.mrb[0].mxu0
    %v104 = vadd.f32 %v52, %v103
    %v105 = vpop.f32.mrb[0].mxu0
    %v106 = vpop.f32.mrb[0].mxu0
    %v107 = vadd.f32 %v52, %v106
    %v108 = vpop.f32.mrb[0].mxu0
    %109 = vdwg.mxu0
    %110 = vst [vmem:[#allocation2] sm:$0xff] %v104
    %111 = vst [vmem:[#allocation2 + $0x8] sm:$0xff] %v107
    %v112 = vld [vmem:[%s3] sm:$0xf]
    %v113 = vld [vmem:[%s3 + $0x4] sm:$0xf]
    %v114 = vld [vmem:[%s3 + $0x8] sm:$0xf]
    %v115 = vld [vmem:[%s3 + $0xc] sm:$0xf]
    %v116 = vld [vmem:[%s5] sm:$0x1]
    %v117 = vld [vmem:[#allocation2] sm:$0x3]
    %v119 = vlaneseq
    %v120 = vshrl.u32 %v119, 7
    %v121 = vsub.s32 0, %v120
    %v122 = vrot.slane %v116, %v121
    %v128 = vunpack.c.l.b16 %v112
    %v129 = vunpack.c.l.b16 %v113
    %v130 = vunpack.c.l.b16 %v114
    %v131 = vunpack.c.l.b16 %v115
    %v132 = vpack.c.b16 %v129, %v128
    %v133 = vpack.c.b16 %v131, %v130
    %vm136 = vcmask 261120
    %v138 = vsel %vm136, 0, 0
    %140 = vmatprep.subr.bf16.mxu0 0
    %141 = vmatpush1.bf16.msra.mxu0 %v132
    %142 = vmatprep.subr.bf16.mxu0 0
    %143 = vmatpush1.bf16.msra.mxu0 %v133
    %144 = vmatprep.subr.bf16.mxu0 0
    %145 = vmatpush1.bf16.msra.mxu0 0
    %146 = vmatprep.subr.bf16.mxu0 0
    %147 = vmatpush1.bf16.msra.mxu0 0
    %148 = vmatprep.subr.bf16.mxu0 0
    %149 = vmatpush1.bf16.msra.mxu0 0
    %150 = vmatprep.subr.bf16.mxu0 0
    %151 = vmatpush1.bf16.msra.mxu0 0
    %152 = vmatprep.subr.bf16.mxu0 0
    %153 = vmatpush1.bf16.msra.mxu0 0
    %154 = vmatprep.subr.bf16.mxu0 0
    %155 = vmatpush1.bf16.msra.mxu0 0
    %156 = vmatprep.subr.bf16.mxu0 0
    %157 = vmatpush1.bf16.msra.mxu0 0
    %158 = vmatprep.subr.bf16.mxu0 0
    %159 = vmatpush1.bf16.msra.mxu0 0
    %160 = vmatprep.subr.bf16.mxu0 0
    %161 = vmatpush1.bf16.msra.mxu0 0
    %162 = vmatprep.subr.bf16.mxu0 0
    %163 = vmatpush1.bf16.msra.mxu0 0
    %164 = vmatprep.subr.bf16.mxu0 0
    %165 = vmatpush1.bf16.msra.mxu0 0
    %166 = vmatprep.subr.bf16.mxu0 0
    %167 = vmatpush1.bf16.msra.mxu0 0
    %168 = vmatprep.subr.bf16.mxu0 0
    %169 = vmatpush1.bf16.msra.mxu0 0
    %170 = vmatprep.subr.bf16.mxu0 0
    %171 = vmatpush1.bf16.msra.mxu0 0
    %172 = vmatprep.mubr.bf16.mxu0 0
    %173 = vmatmul.mubr.bf16.gmra.mrb[0].mxu0 %v138
    %v174 = vpop.f32.mrb[0].mxu0
    %v175 = vadd.f32 %v122, %v174
    %v176 = vpop.f32.mrb[0].mxu0
    %v177 = vpop.f32.mrb[0].mxu0
    %v178 = vpop.f32.mrb[0].mxu0
    %179 = vdwg.mxu0
    %v180 = vadd.f32 %v117, %v175
    %v181 = vxor.u32 %v180, 2147483648
    %v182 = vmul.f32 %v181, 1.442695
    %v183 = vpow.pop %v182
    %v184 = vadd.f32 %v183, 1.0
    %v185 = vrcp.pop %v184
    %v186 = vmul.f32 1.0, %v185
    %188 = vrot.lane.b32.xlu0 %v175, 64
    %v189 = vpop.permute.xlu0 %188
    %v191 = vmul.f32 %v186, %v189
    %193 = vrot.lane.b32.xlu0 %v191, 64
    %v194 = vpop.permute.xlu0 %193
    %v196 = vadd.f32 %v117, %v194
    %v197 = vtanh.pop %v196
    %v198 = vsub.f32 1.0, %v186
    %200 = vrot.lane.b32.xlu0 %v197, 96
    %v201 = vpop.permute.xlu0 %200
    %v203 = vmul.f32 %v198, %v201
    %v204 = vmul.f32 %v186, 0.0
    %v205 = vadd.f32 %v203, %v204
    %v206 = vld [vmem:[%s1] sm:$0x3]
    %208 = vset.pattern.permute.xlu0 0
    %209 = vperm.xlu0 %208, %v206
    %v210 = vpop.permute.xlu0 %209
    %v212 = vmul.f32 %v210, %v205
    %v213 = vsub.f32 1.0, %v206
    %215 = vset.pattern.permute.xlu0 0
    %216 = vperm.xlu0 %215, %v213
    %v217 = vpop.permute.xlu0 %216
    %v219 = vmul.f32 %v217, 0.0
    %v220 = vadd.f32 %v212, %v219
    %222 = vrot.lane.b32.xlu0 %v220, 96
    %v223 = vpop.permute.xlu0 %222
    %vm225 = vcmask 254976
    %226 = vst.msk [vmem:[#allocation3] sm:$0x3] %vm225, %v223
    %v227 = vld [vmem:[#allocation2 + $0x2] sm:$0x3]
    %v228 = vpack.c.bf16 %v220, %v220
    %230 = vrot.lane.b32.xlu0 %v228, 96
    %v231 = vpop.permute.xlu0 %230
    %v233 = vsel %vm136, %v231, 0
    %235 = vmatprep.subr.bf16.mxu0 0
    %236 = vmatpush1.bf16.msra.mxu0 %v132
    %237 = vmatprep.subr.bf16.mxu0 0
    %238 = vmatpush1.bf16.msra.mxu0 %v133
    %239 = vmatprep.subr.bf16.mxu0 0
    %240 = vmatpush1.bf16.msra.mxu0 0
    %241 = vmatprep.subr.bf16.mxu0 0
    %242 = vmatpush1.bf16.msra.mxu0 0
    %243 = vmatprep.subr.bf16.mxu0 0
    %244 = vmatpush1.bf16.msra.mxu0 0
    %245 = vmatprep.subr.bf16.mxu0 0
    %246 = vmatpush1.bf16.msra.mxu0 0
    %247 = vmatprep.subr.bf16.mxu0 0
    %248 = vmatpush1.bf16.msra.mxu0 0
    %249 = vmatprep.subr.bf16.mxu0 0
    %250 = vmatpush1.bf16.msra.mxu0 0
    %251 = vmatprep.subr.bf16.mxu0 0
    %252 = vmatpush1.bf16.msra.mxu0 0
    %253 = vmatprep.subr.bf16.mxu0 0
    %254 = vmatpush1.bf16.msra.mxu0 0
    %255 = vmatprep.subr.bf16.mxu0 0
    %256 = vmatpush1.bf16.msra.mxu0 0
    %257 = vmatprep.subr.bf16.mxu0 0
    %258 = vmatpush1.bf16.msra.mxu0 0
    %259 = vmatprep.subr.bf16.mxu0 0
    %260 = vmatpush1.bf16.msra.mxu0 0
    %261 = vmatprep.subr.bf16.mxu0 0
    %262 = vmatpush1.bf16.msra.mxu0 0
    %263 = vmatprep.subr.bf16.mxu0 0
    %264 = vmatpush1.bf16.msra.mxu0 0
    %265 = vmatprep.subr.bf16.mxu0 0
    %266 = vmatpush1.bf16.msra.mxu0 0
    %267 = vmatprep.mubr.bf16.mxu0 0
    %268 = vmatmul.mubr.bf16.gmra.mrb[0].mxu0 %v233
    %v269 = vpop.f32.mrb[0].mxu0
    %v270 = vadd.f32 %v122, %v269
    %v271 = vpop.f32.mrb[0].mxu0
    %v272 = vpop.f32.mrb[0].mxu0
    %v273 = vpop.f32.mrb[0].mxu0
    %274 = vdwg.mxu0
    %v275 = vadd.f32 %v227, %v270
    %v276 = vxor.u32 %v275, 2147483648
    %v277 = vmul.f32 %v276, 1.442695
    %v278 = vpow.pop %v277
    %v279 = vadd.f32 %v278, 1.0
    %v280 = vrcp.pop %v279
    %v281 = vmul.f32 1.0, %v280
    %283 = vrot.lane.b32.xlu0 %v270, 64
    %v284 = vpop.permute.xlu0 %283
    %v286 = vmul.f32 %v281, %v284
    %288 = vrot.lane.b32.xlu0 %v286, 64
    %v289 = vpop.permute.xlu0 %288
    %v291 = vadd.f32 %v227, %v289
    %v292 = vtanh.pop %v291
    %v293 = vsub.f32 1.0, %v281
    %295 = vrot.lane.b32.xlu0 %v292, 96
    %v296 = vpop.permute.xlu0 %295
    %v298 = vmul.f32 %v293, %v296
    %v299 = vmul.f32 %v281, %v220
    %v300 = vadd.f32 %v298, %v299
    %v301 = vld [vmem:[%s1 + $0x2] sm:$0x3]
    %303 = vset.pattern.permute.xlu0 0
    %304 = vperm.xlu0 %303, %v301
    %v305 = vpop.permute.xlu0 %304
    %v307 = vmul.f32 %v305, %v300
    %v308 = vsub.f32 1.0, %v301
    %310 = vset.pattern.permute.xlu0 0
    %311 = vperm.xlu0 %310, %v308
    %v312 = vpop.permute.xlu0 %311
    %v314 = vmul.f32 %v312, %v220
    %v315 = vadd.f32 %v307, %v314
    %317 = vrot.lane.b32.xlu0 %v315, 96
    %v318 = vpop.permute.xlu0 %317
    %320 = vst.msk [vmem:[#allocation3 + $0x2] sm:$0x3] %vm225, %v318
    %v321 = vld [vmem:[#allocation2 + $0x4] sm:$0x3]
    %v322 = vpack.c.bf16 %v315, %v315
    %324 = vrot.lane.b32.xlu0 %v322, 96
    %v325 = vpop.permute.xlu0 %324
    %v327 = vsel %vm136, %v325, 0
    %329 = vmatprep.subr.bf16.mxu0 0
    %330 = vmatpush1.bf16.msra.mxu0 %v132
    %331 = vmatprep.subr.bf16.mxu0 0
    %332 = vmatpush1.bf16.msra.mxu0 %v133
    %333 = vmatprep.subr.bf16.mxu0 0
    %334 = vmatpush1.bf16.msra.mxu0 0
    %335 = vmatprep.subr.bf16.mxu0 0
    %336 = vmatpush1.bf16.msra.mxu0 0
    %337 = vmatprep.subr.bf16.mxu0 0
    %338 = vmatpush1.bf16.msra.mxu0 0
    %339 = vmatprep.subr.bf16.mxu0 0
    %340 = vmatpush1.bf16.msra.mxu0 0
    %341 = vmatprep.subr.bf16.mxu0 0
    %342 = vmatpush1.bf16.msra.mxu0 0
    %343 = vmatprep.subr.bf16.mxu0 0
    %344 = vmatpush1.bf16.msra.mxu0 0
    %345 = vmatprep.subr.bf16.mxu0 0
    %346 = vmatpush1.bf16.msra.mxu0 0
    %347 = vmatprep.subr.bf16.mxu0 0
    %348 = vmatpush1.bf16.msra.mxu0 0
    %349 = vmatprep.subr.bf16.mxu0 0
    %350 = vmatpush1.bf16.msra.mxu0 0
    %351 = vmatprep.subr.bf16.mxu0 0
    %352 = vmatpush1.bf16.msra.mxu0 0
    %353 = vmatprep.subr.bf16.mxu0 0
    %354 = vmatpush1.bf16.msra.mxu0 0
    %355 = vmatprep.subr.bf16.mxu0 0
    %356 = vmatpush1.bf16.msra.mxu0 0
    %357 = vmatprep.subr.bf16.mxu0 0
    %358 = vmatpush1.bf16.msra.mxu0 0
    %359 = vmatprep.subr.bf16.mxu0 0
    %360 = vmatpush1.bf16.msra.mxu0 0
    %361 = vmatprep.mubr.bf16.mxu0 0
    %362 = vmatmul.mubr.bf16.gmra.mrb[0].mxu0 %v327
    %v363 = vpop.f32.mrb[0].mxu0
    %v364 = vadd.f32 %v122, %v363
    %v365 = vpop.f32.mrb[0].mxu0
    %v366 = vpop.f32.mrb[0].mxu0
    %v367 = vpop.f32.mrb[0].mxu0
    %368 = vdwg.mxu0
    %v369 = vadd.f32 %v321, %v364
    %v370 = vxor.u32 %v369, 2147483648
    %v371 = vmul.f32 %v370, 1.442695
    %v372 = vpow.pop %v371
    %v373 = vadd.f32 %v372, 1.0
    %v374 = vrcp.pop %v373
    %v375 = vmul.f32 1.0, %v374
    %377 = vrot.lane.b32.xlu0 %v364, 64
    %v378 = vpop.permute.xlu0 %377
    %v380 = vmul.f32 %v375, %v378
    %382 = vrot.lane.b32.xlu0 %v380, 64
    %v383 = vpop.permute.xlu0 %382
    %v385 = vadd.f32 %v321, %v383
    %v386 = vtanh.pop %v385
    %v387 = vsub.f32 1.0, %v375
    %389 = vrot.lane.b32.xlu0 %v386, 96
    %v390 = vpop.permute.xlu0 %389
    %v392 = vmul.f32 %v387, %v390
    %v393 = vmul.f32 %v375, %v315
    %v394 = vadd.f32 %v392, %v393
    %v395 = vld [vmem:[%s1 + $0x4] sm:$0x3]
    %397 = vset.pattern.permute.xlu0 0
    %398 = vperm.xlu0 %397, %v395
    %v399 = vpop.permute.xlu0 %398
    %v401 = vmul.f32 %v399, %v394
    %v402 = vsub.f32 1.0, %v395
    %404 = vset.pattern.permute.xlu0 0
    %405 = vperm.xlu0 %404, %v402
    %v406 = vpop.permute.xlu0 %405
    %v408 = vmul.f32 %v406, %v315
    %v409 = vadd.f32 %v401, %v408
    %411 = vrot.lane.b32.xlu0 %v409, 96
    %v412 = vpop.permute.xlu0 %411
    %414 = vst.msk [vmem:[#allocation3 + $0x4] sm:$0x3] %vm225, %v412
    %v415 = vld [vmem:[#allocation2 + $0x6] sm:$0x3]
    %v416 = vpack.c.bf16 %v409, %v409
    %418 = vrot.lane.b32.xlu0 %v416, 96
    %v419 = vpop.permute.xlu0 %418
    %v421 = vsel %vm136, %v419, 0
    %423 = vmatprep.subr.bf16.mxu0 0
    %424 = vmatpush1.bf16.msra.mxu0 %v132
    %425 = vmatprep.subr.bf16.mxu0 0
    %426 = vmatpush1.bf16.msra.mxu0 %v133
    %427 = vmatprep.subr.bf16.mxu0 0
    %428 = vmatpush1.bf16.msra.mxu0 0
    %429 = vmatprep.subr.bf16.mxu0 0
    %430 = vmatpush1.bf16.msra.mxu0 0
    %431 = vmatprep.subr.bf16.mxu0 0
    %432 = vmatpush1.bf16.msra.mxu0 0
    %433 = vmatprep.subr.bf16.mxu0 0
    %434 = vmatpush1.bf16.msra.mxu0 0
    %435 = vmatprep.subr.bf16.mxu0 0
    %436 = vmatpush1.bf16.msra.mxu0 0
    %437 = vmatprep.subr.bf16.mxu0 0
    %438 = vmatpush1.bf16.msra.mxu0 0
    %439 = vmatprep.subr.bf16.mxu0 0
    %440 = vmatpush1.bf16.msra.mxu0 0
    %441 = vmatprep.subr.bf16.mxu0 0
    %442 = vmatpush1.bf16.msra.mxu0 0
    %443 = vmatprep.subr.bf16.mxu0 0
    %444 = vmatpush1.bf16.msra.mxu0 0
    %445 = vmatprep.subr.bf16.mxu0 0
    %446 = vmatpush1.bf16.msra.mxu0 0
    %447 = vmatprep.subr.bf16.mxu0 0
    %448 = vmatpush1.bf16.msra.mxu0 0
    %449 = vmatprep.subr.bf16.mxu0 0
    %450 = vmatpush1.bf16.msra.mxu0 0
    %451 = vmatprep.subr.bf16.mxu0 0
    %452 = vmatpush1.bf16.msra.mxu0 0
    %453 = vmatprep.subr.bf16.mxu0 0
    %454 = vmatpush1.bf16.msra.mxu0 0
    %455 = vmatprep.mubr.bf16.mxu0 0
    %456 = vmatmul.mubr.bf16.gmra.mrb[0].mxu0 %v421
    %v457 = vpop.f32.mrb[0].mxu0
    %v458 = vadd.f32 %v122, %v457
    %v459 = vpop.f32.mrb[0].mxu0
    %v460 = vpop.f32.mrb[0].mxu0
    %v461 = vpop.f32.mrb[0].mxu0
    %462 = vdwg.mxu0
    %v463 = vadd.f32 %v415, %v458
    %v464 = vxor.u32 %v463, 2147483648
    %v465 = vmul.f32 %v464, 1.442695
    %v466 = vpow.pop %v465
    %v467 = vadd.f32 %v466, 1.0
    %v468 = vrcp.pop %v467
    %v469 = vmul.f32 1.0, %v468
    %471 = vrot.lane.b32.xlu0 %v458, 64
    %v472 = vpop.permute.xlu0 %471
    %v474 = vmul.f32 %v469, %v472
    %476 = vrot.lane.b32.xlu0 %v474, 64
    %v477 = vpop.permute.xlu0 %476
    %v479 = vadd.f32 %v415, %v477
    %v480 = vtanh.pop %v479
    %v481 = vsub.f32 1.0, %v469
    %483 = vrot.lane.b32.xlu0 %v480, 96
    %v484 = vpop.permute.xlu0 %483
    %v486 = vmul.f32 %v481, %v484
    %v487 = vmul.f32 %v469, %v409
    %v488 = vadd.f32 %v486, %v487
    %v489 = vld [vmem:[%s1 + $0x6] sm:$0x3]
    %491 = vset.pattern.permute.xlu0 0
    %492 = vperm.xlu0 %491, %v489
    %v493 = vpop.permute.xlu0 %492
    %v495 = vmul.f32 %v493, %v488
    %v496 = vsub.f32 1.0, %v489
    %498 = vset.pattern.permute.xlu0 0
    %499 = vperm.xlu0 %498, %v496
    %v500 = vpop.permute.xlu0 %499
    %v502 = vmul.f32 %v500, %v409
    %v503 = vadd.f32 %v495, %v502
    %505 = vrot.lane.b32.xlu0 %v503, 96
    %v506 = vpop.permute.xlu0 %505
    %508 = vst.msk [vmem:[#allocation3 + $0x6] sm:$0x3] %vm225, %v506
    %v509 = vld [vmem:[#allocation2 + $0x8] sm:$0x3]
    %v510 = vpack.c.bf16 %v503, %v503
    %512 = vrot.lane.b32.xlu0 %v510, 96
    %v513 = vpop.permute.xlu0 %512
    %v515 = vsel %vm136, %v513, 0
    %517 = vmatprep.subr.bf16.mxu0 0
    %518 = vmatpush1.bf16.msra.mxu0 %v132
    %519 = vmatprep.subr.bf16.mxu0 0
    %520 = vmatpush1.bf16.msra.mxu0 %v133
    %521 = vmatprep.subr.bf16.mxu0 0
    %522 = vmatpush1.bf16.msra.mxu0 0
    %523 = vmatprep.subr.bf16.mxu0 0
    %524 = vmatpush1.bf16.msra.mxu0 0
    %525 = vmatprep.subr.bf16.mxu0 0
    %526 = vmatpush1.bf16.msra.mxu0 0
    %527 = vmatprep.subr.bf16.mxu0 0
    %528 = vmatpush1.bf16.msra.mxu0 0
    %529 = vmatprep.subr.bf16.mxu0 0
    %530 = vmatpush1.bf16.msra.mxu0 0
    %531 = vmatprep.subr.bf16.mxu0 0
    %532 = vmatpush1.bf16.msra.mxu0 0
    %533 = vmatprep.subr.bf16.mxu0 0
    %534 = vmatpush1.bf16.msra.mxu0 0
    %535 = vmatprep.subr.bf16.mxu0 0
    %536 = vmatpush1.bf16.msra.mxu0 0
    %537 = vmatprep.subr.bf16.mxu0 0
    %538 = vmatpush1.bf16.msra.mxu0 0
    %539 = vmatprep.subr.bf16.mxu0 0
    %540 = vmatpush1.bf16.msra.mxu0 0
    %541 = vmatprep.subr.bf16.mxu0 0
    %542 = vmatpush1.bf16.msra.mxu0 0
    %543 = vmatprep.subr.bf16.mxu0 0
    %544 = vmatpush1.bf16.msra.mxu0 0
    %545 = vmatprep.subr.bf16.mxu0 0
    %546 = vmatpush1.bf16.msra.mxu0 0
    %547 = vmatprep.subr.bf16.mxu0 0
    %548 = vmatpush1.bf16.msra.mxu0 0
    %549 = vmatprep.mubr.bf16.mxu0 0
    %550 = vmatmul.mubr.bf16.gmra.mrb[0].mxu0 %v515
    %v551 = vpop.f32.mrb[0].mxu0
    %v552 = vadd.f32 %v122, %v551
    %v553 = vpop.f32.mrb[0].mxu0
    %v554 = vpop.f32.mrb[0].mxu0
    %v555 = vpop.f32.mrb[0].mxu0
    %556 = vdwg.mxu0
    %v557 = vadd.f32 %v509, %v552
    %v558 = vxor.u32 %v557, 2147483648
    %v559 = vmul.f32 %v558, 1.442695
    %v560 = vpow.pop %v559
    %v561 = vadd.f32 %v560, 1.0
    %v562 = vrcp.pop %v561
    %v563 = vmul.f32 1.0, %v562
    %565 = vrot.lane.b32.xlu0 %v552, 64
    %v566 = vpop.permute.xlu0 %565
    %v568 = vmul.f32 %v563, %v566
    %570 = vrot.lane.b32.xlu0 %v568, 64
    %v571 = vpop.permute.xlu0 %570
    %v573 = vadd.f32 %v509, %v571
    %v574 = vtanh.pop %v573
    %v575 = vsub.f32 1.0, %v563
    %577 = vrot.lane.b32.xlu0 %v574, 96
    %v578 = vpop.permute.xlu0 %577
    %v580 = vmul.f32 %v575, %v578
    %v581 = vmul.f32 %v563, %v503
    %v582 = vadd.f32 %v580, %v581
    %v583 = vld [vmem:[%s1 + $0x8] sm:$0x3]
    %585 = vset.pattern.permute.xlu0 0
    %586 = vperm.xlu0 %585, %v583
    %v587 = vpop.permute.xlu0 %586
    %v589 = vmul.f32 %v587, %v582
    %v590 = vsub.f32 1.0, %v583
    %592 = vset.pattern.permute.xlu0 0
    %593 = vperm.xlu0 %592, %v590
    %v594 = vpop.permute.xlu0 %593
    %v596 = vmul.f32 %v594, %v503
    %v597 = vadd.f32 %v589, %v596
    %599 = vrot.lane.b32.xlu0 %v597, 96
    %v600 = vpop.permute.xlu0 %599
    %602 = vst.msk [vmem:[#allocation3 + $0x8] sm:$0x3] %vm225, %v600
    %v603 = vld [vmem:[#allocation2 + $0xa] sm:$0x3]
    %v604 = vpack.c.bf16 %v597, %v597
    %606 = vrot.lane.b32.xlu0 %v604, 96
    %v607 = vpop.permute.xlu0 %606
    %v609 = vsel %vm136, %v607, 0
    %611 = vmatprep.subr.bf16.mxu0 0
    %612 = vmatpush1.bf16.msra.mxu0 %v132
    %613 = vmatprep.subr.bf16.mxu0 0
    %614 = vmatpush1.bf16.msra.mxu0 %v133
    %615 = vmatprep.subr.bf16.mxu0 0
    %616 = vmatpush1.bf16.msra.mxu0 0
    %617 = vmatprep.subr.bf16.mxu0 0
    %618 = vmatpush1.bf16.msra.mxu0 0
    %619 = vmatprep.subr.bf16.mxu0 0
    %620 = vmatpush1.bf16.msra.mxu0 0
    %621 = vmatprep.subr.bf16.mxu0 0
    %622 = vmatpush1.bf16.msra.mxu0 0
    %623 = vmatprep.subr.bf16.mxu0 0
    %624 = vmatpush1.bf16.msra.mxu0 0
    %625 = vmatprep.subr.bf16.mxu0 0
    %626 = vmatpush1.bf16.msra.mxu0 0
    %627 = vmatprep.subr.bf16.mxu0 0
    %628 = vmatpush1.bf16.msra.mxu0 0
    %629 = vmatprep.subr.bf16.mxu0 0
    %630 = vmatpush1.bf16.msra.mxu0 0
    %631 = vmatprep.subr.bf16.mxu0 0
    %632 = vmatpush1.bf16.msra.mxu0 0
    %633 = vmatprep.subr.bf16.mxu0 0
    %634 = vmatpush1.bf16.msra.mxu0 0
    %635 = vmatprep.subr.bf16.mxu0 0
    %636 = vmatpush1.bf16.msra.mxu0 0
    %637 = vmatprep.subr.bf16.mxu0 0
    %638 = vmatpush1.bf16.msra.mxu0 0
    %639 = vmatprep.subr.bf16.mxu0 0
    %640 = vmatpush1.bf16.msra.mxu0 0
    %641 = vmatprep.subr.bf16.mxu0 0
    %642 = vmatpush1.bf16.msra.mxu0 0
    %643 = vmatprep.mubr.bf16.mxu0 0
    %644 = vmatmul.mubr.bf16.gmra.mrb[0].mxu0 %v609
    %v645 = vpop.f32.mrb[0].mxu0
    %v646 = vadd.f32 %v122, %v645
    %v647 = vpop.f32.mrb[0].mxu0
    %v648 = vpop.f32.mrb[0].mxu0
    %v649 = vpop.f32.mrb[0].mxu0
    %650 = vdwg.mxu0
    %v651 = vadd.f32 %v603, %v646
    %v652 = vxor.u32 %v651, 2147483648
    %v653 = vmul.f32 %v652, 1.442695
    %v654 = vpow.pop %v653
    %v655 = vadd.f32 %v654, 1.0
    %v656 = vrcp.pop %v655
    %v657 = vmul.f32 1.0, %v656
    %659 = vrot.lane.b32.xlu0 %v646, 64
    %v660 = vpop.permute.xlu0 %659
    %v662 = vmul.f32 %v657, %v660
    %664 = vrot.lane.b32.xlu0 %v662, 64
    %v665 = vpop.permute.xlu0 %664
    %v667 = vadd.f32 %v603, %v665
    %v668 = vtanh.pop %v667
    %v669 = vsub.f32 1.0, %v657
    %671 = vrot.lane.b32.xlu0 %v668, 96
    %v672 = vpop.permute.xlu0 %671
    %v674 = vmul.f32 %v669, %v672
    %v675 = vmul.f32 %v657, %v597
    %v676 = vadd.f32 %v674, %v675
    %v677 = vld [vmem:[%s1 + $0xa] sm:$0x3]
    %679 = vset.pattern.permute.xlu0 0
    %680 = vperm.xlu0 %679, %v677
    %v681 = vpop.permute.xlu0 %680
    %v683 = vmul.f32 %v681, %v676
    %v684 = vsub.f32 1.0, %v677
    %686 = vset.pattern.permute.xlu0 0
    %687 = vperm.xlu0 %686, %v684
    %v688 = vpop.permute.xlu0 %687
    %v690 = vmul.f32 %v688, %v597
    %v691 = vadd.f32 %v683, %v690
    %693 = vrot.lane.b32.xlu0 %v691, 96
    %v694 = vpop.permute.xlu0 %693
    %696 = vst.msk [vmem:[#allocation3 + $0xa] sm:$0x3] %vm225, %v694
    %v697 = vld [vmem:[#allocation2 + $0xc] sm:$0x3]
    %v698 = vpack.c.bf16 %v691, %v691
    %700 = vrot.lane.b32.xlu0 %v698, 96
    %v701 = vpop.permute.xlu0 %700
    %v703 = vsel %vm136, %v701, 0
    %705 = vmatprep.subr.bf16.mxu0 0
    %706 = vmatpush1.bf16.msra.mxu0 %v132
    %707 = vmatprep.subr.bf16.mxu0 0
    %708 = vmatpush1.bf16.msra.mxu0 %v133
    %709 = vmatprep.subr.bf16.mxu0 0
    %710 = vmatpush1.bf16.msra.mxu0 0
    %711 = vmatprep.subr.bf16.mxu0 0
    %712 = vmatpush1.bf16.msra.mxu0 0
    %713 = vmatprep.subr.bf16.mxu0 0
    %714 = vmatpush1.bf16.msra.mxu0 0
    %715 = vmatprep.subr.bf16.mxu0 0
    %716 = vmatpush1.bf16.msra.mxu0 0
    %717 = vmatprep.subr.bf16.mxu0 0
    %718 = vmatpush1.bf16.msra.mxu0 0
    %719 = vmatprep.subr.bf16.mxu0 0
    %720 = vmatpush1.bf16.msra.mxu0 0
    %721 = vmatprep.subr.bf16.mxu0 0
    %722 = vmatpush1.bf16.msra.mxu0 0
    %723 = vmatprep.subr.bf16.mxu0 0
    %724 = vmatpush1.bf16.msra.mxu0 0
    %725 = vmatprep.subr.bf16.mxu0 0
    %726 = vmatpush1.bf16.msra.mxu0 0
    %727 = vmatprep.subr.bf16.mxu0 0
    %728 = vmatpush1.bf16.msra.mxu0 0
    %729 = vmatprep.subr.bf16.mxu0 0
    %730 = vmatpush1.bf16.msra.mxu0 0
    %731 = vmatprep.subr.bf16.mxu0 0
    %732 = vmatpush1.bf16.msra.mxu0 0
    %733 = vmatprep.subr.bf16.mxu0 0
    %734 = vmatpush1.bf16.msra.mxu0 0
    %735 = vmatprep.subr.bf16.mxu0 0
    %736 = vmatpush1.bf16.msra.mxu0 0
    %737 = vmatprep.mubr.bf16.mxu0 0
    %738 = vmatmul.mubr.bf16.gmra.mrb[0].mxu0 %v703
    %v739 = vpop.f32.mrb[0].mxu0
    %v740 = vadd.f32 %v122, %v739
    %v741 = vpop.f32.mrb[0].mxu0
    %v742 = vpop.f32.mrb[0].mxu0
    %v743 = vpop.f32.mrb[0].mxu0
    %744 = vdwg.mxu0
    %v745 = vadd.f32 %v697, %v740
    %v746 = vxor.u32 %v745, 2147483648
    %v747 = vmul.f32 %v746, 1.442695
    %v748 = vpow.pop %v747
    %v749 = vadd.f32 %v748, 1.0
    %v750 = vrcp.pop %v749
    %v751 = vmul.f32 1.0, %v750
    %753 = vrot.lane.b32.xlu0 %v740, 64
    %v754 = vpop.permute.xlu0 %753
    %v756 = vmul.f32 %v751, %v754
    %758 = vrot.lane.b32.xlu0 %v756, 64
    %v759 = vpop.permute.xlu0 %758
    %v761 = vadd.f32 %v697, %v759
    %v762 = vtanh.pop %v761
    %v763 = vsub.f32 1.0, %v751
    %765 = vrot.lane.b32.xlu0 %v762, 96
    %v766 = vpop.permute.xlu0 %765
    %v768 = vmul.f32 %v763, %v766
    %v769 = vmul.f32 %v751, %v691
    %v770 = vadd.f32 %v768, %v769
    %v771 = vld [vmem:[%s1 + $0xc] sm:$0x3]
    %773 = vset.pattern.permute.xlu0 0
    %774 = vperm.xlu0 %773, %v771
    %v775 = vpop.permute.xlu0 %774
    %v777 = vmul.f32 %v775, %v770
    %v778 = vsub.f32 1.0, %v771
    %780 = vset.pattern.permute.xlu0 0
    %781 = vperm.xlu0 %780, %v778
    %v782 = vpop.permute.xlu0 %781
    %v784 = vmul.f32 %v782, %v691
    %v785 = vadd.f32 %v777, %v784
    %787 = vrot.lane.b32.xlu0 %v785, 96
    %v788 = vpop.permute.xlu0 %787
    %790 = vst.msk [vmem:[#allocation3 + $0xc] sm:$0x3] %vm225, %v788
    %v791 = vld [vmem:[#allocation2 + $0xe] sm:$0x3]
    %v792 = vpack.c.bf16 %v785, %v785
    %794 = vrot.lane.b32.xlu0 %v792, 96
    %v795 = vpop.permute.xlu0 %794
    %v797 = vsel %vm136, %v795, 0
    %799 = vmatprep.subr.bf16.mxu0 0
    %800 = vmatpush1.bf16.msra.mxu0 %v132
    %801 = vmatprep.subr.bf16.mxu0 0
    %802 = vmatpush1.bf16.msra.mxu0 %v133
    %803 = vmatprep.subr.bf16.mxu0 0
    %804 = vmatpush1.bf16.msra.mxu0 0
    %805 = vmatprep.subr.bf16.mxu0 0
    %806 = vmatpush1.bf16.msra.mxu0 0
    %807 = vmatprep.subr.bf16.mxu0 0
    %808 = vmatpush1.bf16.msra.mxu0 0
    %809 = vmatprep.subr.bf16.mxu0 0
    %810 = vmatpush1.bf16.msra.mxu0 0
    %811 = vmatprep.subr.bf16.mxu0 0
    %812 = vmatpush1.bf16.msra.mxu0 0
    %813 = vmatprep.subr.bf16.mxu0 0
    %814 = vmatpush1.bf16.msra.mxu0 0
    %815 = vmatprep.subr.bf16.mxu0 0
    %816 = vmatpush1.bf16.msra.mxu0 0
    %817 = vmatprep.subr.bf16.mxu0 0
    %818 = vmatpush1.bf16.msra.mxu0 0
    %819 = vmatprep.subr.bf16.mxu0 0
    %820 = vmatpush1.bf16.msra.mxu0 0
    %821 = vmatprep.subr.bf16.mxu0 0
    %822 = vmatpush1.bf16.msra.mxu0 0
    %823 = vmatprep.subr.bf16.mxu0 0
    %824 = vmatpush1.bf16.msra.mxu0 0
    %825 = vmatprep.subr.bf16.mxu0 0
    %826 = vmatpush1.bf16.msra.mxu0 0
    %827 = vmatprep.subr.bf16.mxu0 0
    %828 = vmatpush1.bf16.msra.mxu0 0
    %829 = vmatprep.subr.bf16.mxu0 0
    %830 = vmatpush1.bf16.msra.mxu0 0
    %831 = vmatprep.mubr.bf16.mxu0 0
    %832 = vmatmul.mubr.bf16.gmra.mrb[0].mxu0 %v797
    %v833 = vpop.f32.mrb[0].mxu0
    %v834 = vadd.f32 %v122, %v833
    %v835 = vpop.f32.mrb[0].mxu0
    %v836 = vpop.f32.mrb[0].mxu0
    %v837 = vpop.f32.mrb[0].mxu0
    %838 = vdwg.mxu0
    %v839 = vadd.f32 %v791, %v834
    %v840 = vxor.u32 %v839, 2147483648
    %v841 = vmul.f32 %v840, 1.442695
    %v842 = vpow.pop %v841
    %v843 = vadd.f32 %v842, 1.0
    %v844 = vrcp.pop %v843
    %v845 = vmul.f32 1.0, %v844
    %847 = vrot.lane.b32.xlu0 %v834, 64
    %v848 = vpop.permute.xlu0 %847
    %v850 = vmul.f32 %v845, %v848
    %852 = vrot.lane.b32.xlu0 %v850, 64
    %v853 = vpop.permute.xlu0 %852
    %v855 = vadd.f32 %v791, %v853
    %v856 = vtanh.pop %v855
    %v857 = vsub.f32 1.0, %v845
    %859 = vrot.lane.b32.xlu0 %v856, 96
    %v860 = vpop.permute.xlu0 %859
    %v862 = vmul.f32 %v857, %v860
    %v863 = vmul.f32 %v845, %v785
    %v864 = vadd.f32 %v862, %v863
    %v865 = vld [vmem:[%s1 + $0xe] sm:$0x3]
    %867 = vset.pattern.permute.xlu0 0
    %868 = vperm.xlu0 %867, %v865
    %v869 = vpop.permute.xlu0 %868
    %v871 = vmul.f32 %v869, %v864
    %v872 = vsub.f32 1.0, %v865
    %874 = vset.pattern.permute.xlu0 0
    %875 = vperm.xlu0 %874, %v872
    %v876 = vpop.permute.xlu0 %875
    %v878 = vmul.f32 %v876, %v785
    %v879 = vadd.f32 %v871, %v878
    %881 = vrot.lane.b32.xlu0 %v879, 96
    %v882 = vpop.permute.xlu0 %881
    %884 = vst.msk [vmem:[#allocation3 + $0xe] sm:$0x3] %vm225, %v882
    %v885 = vld [vmem:[#allocation3] sm:$0xff]
    %v886 = vld [vmem:[#allocation3 + $0x8] sm:$0xff]
    %v887 = vpack.c.bf16 %v886, %v885
    %v888 = vld [vmem:[%s6] sm:$0xf]
    %v889 = vld [vmem:[%s6 + $0x4] sm:$0xf]
    %v890 = vld [vmem:[%s6 + $0x8] sm:$0xf]
    %v891 = vld [vmem:[%s6 + $0xc] sm:$0xf]
    %v892 = vld [vmem:[%s8] sm:$0x1]
    %v894 = vlaneseq
    %v895 = vshrl.u32 %v894, 7
    %v896 = vsub.s32 0, %v895
    %v897 = vrot.slane %v892, %v896
    %v903 = vunpack.c.l.b16 %v888
    %v904 = vunpack.c.l.b16 %v889
    %v905 = vunpack.c.l.b16 %v890
    %v906 = vunpack.c.l.b16 %v891
    %v907 = vpack.c.b16 %v904, %v903
    %v908 = vpack.c.b16 %v906, %v905
    %v912 = vsel %vm136, %v887, 0
    %914 = vmatprep.subr.bf16.mxu0 0
    %915 = vmatpush1.bf16.msra.mxu0 %v907
    %916 = vmatprep.subr.bf16.mxu0 0
    %917 = vmatpush1.bf16.msra.mxu0 %v908
    %918 = vmatprep.subr.bf16.mxu0 0
    %919 = vmatpush1.bf16.msra.mxu0 0
    %920 = vmatprep.subr.bf16.mxu0 0
    %921 = vmatpush1.bf16.msra.mxu0 0
    %922 = vmatprep.subr.bf16.mxu0 0
    %923 = vmatpush1.bf16.msra.mxu0 0
    %924 = vmatprep.subr.bf16.mxu0 0
    %925 = vmatpush1.bf16.msra.mxu0 0
    %926 = vmatprep.subr.bf16.mxu0 0
    %927 = vmatpush1.bf16.msra.mxu0 0
    %928 = vmatprep.subr.bf16.mxu0 0
    %929 = vmatpush1.bf16.msra.mxu0 0
    %930 = vmatprep.subr.bf16.mxu0 0
    %931 = vmatpush1.bf16.msra.mxu0 0
    %932 = vmatprep.subr.bf16.mxu0 0
    %933 = vmatpush1.bf16.msra.mxu0 0
    %934 = vmatprep.subr.bf16.mxu0 0
    %935 = vmatpush1.bf16.msra.mxu0 0
    %936 = vmatprep.subr.bf16.mxu0 0
    %937 = vmatpush1.bf16.msra.mxu0 0
    %938 = vmatprep.subr.bf16.mxu0 0
    %939 = vmatpush1.bf16.msra.mxu0 0
    %940 = vmatprep.subr.bf16.mxu0 0
    %941 = vmatpush1.bf16.msra.mxu0 0
    %942 = vmatprep.subr.bf16.mxu0 0
    %943 = vmatpush1.bf16.msra.mxu0 0
    %944 = vmatprep.subr.bf16.mxu0 0
    %945 = vmatpush1.bf16.msra.mxu0 0
    %946 = vmatprep.mubr.bf16.mxu0 0
    %947 = vmatmul.mubr.bf16.gmra.mrb[0].mxu0 %v912
    %v948 = vpop.f32.mrb[0].mxu0
    %v949 = vadd.f32 %v897, %v948
    %v950 = vpop.f32.mrb[0].mxu0
    %v951 = vpop.f32.mrb[0].mxu0
    %v952 = vadd.f32 %v897, %v951
    %v953 = vpop.f32.mrb[0].mxu0
    %954 = vdwg.mxu0
    %955 = vst [vmem:[#allocation2] sm:$0xff] %v949
    %956 = vst [vmem:[#allocation2 + $0x8] sm:$0xff] %v952
    %v957 = vld [vmem:[%s7] sm:$0xf]
    %v958 = vld [vmem:[%s7 + $0x4] sm:$0xf]
    %v959 = vld [vmem:[%s7 + $0x8] sm:$0xf]
    %v960 = vld [vmem:[%s7 + $0xc] sm:$0xf]
    %v961 = vld [vmem:[%s9] sm:$0x1]
    %v962 = vld [vmem:[#allocation2] sm:$0x3]
    %v964 = vlaneseq
    %v965 = vshrl.u32 %v964, 7
    %v966 = vsub.s32 0, %v965
    %v967 = vrot.slane %v961, %v966
    %v973 = vunpack.c.l.b16 %v957
    %v974 = vunpack.c.l.b16 %v958
    %v975 = vunpack.c.l.b16 %v959
    %v976 = vunpack.c.l.b16 %v960
    %v977 = vpack.c.b16 %v974, %v973
    %v978 = vpack.c.b16 %v976, %v975
    %981 = vmatprep.subr.bf16.mxu0 0
    %982 = vmatpush1.bf16.msra.mxu0 %v977
    %983 = vmatprep.subr.bf16.mxu0 0
    %984 = vmatpush1.bf16.msra.mxu0 %v978
    %985 = vmatprep.subr.bf16.mxu0 0
    %986 = vmatpush1.bf16.msra.mxu0 0
    %987 = vmatprep.subr.bf16.mxu0 0
    %988 = vmatpush1.bf16.msra.mxu0 0
    %989 = vmatprep.subr.bf16.mxu0 0
    %990 = vmatpush1.bf16.msra.mxu0 0
    %991 = vmatprep.subr.bf16.mxu0 0
    %992 = vmatpush1.bf16.msra.mxu0 0
    %993 = vmatprep.subr.bf16.mxu0 0
    %994 = vmatpush1.bf16.msra.mxu0 0
    %995 = vmatprep.subr.bf16.mxu0 0
    %996 = vmatpush1.bf16.msra.mxu0 0
    %997 = vmatprep.subr.bf16.mxu0 0
    %998 = vmatpush1.bf16.msra.mxu0 0
    %999 = vmatprep.subr.bf16.mxu0 0
    %1000 = vmatpush1.bf16.msra.mxu0 0
    %1001 = vmatprep.subr.bf16.mxu0 0
    %1002 = vmatpush1.bf16.msra.mxu0 0
    %1003 = vmatprep.subr.bf16.mxu0 0
    %1004 = vmatpush1.bf16.msra.mxu0 0
    %1005 = vmatprep.subr.bf16.mxu0 0
    %1006 = vmatpush1.bf16.msra.mxu0 0
    %1007 = vmatprep.subr.bf16.mxu0 0
    %1008 = vmatpush1.bf16.msra.mxu0 0
    %1009 = vmatprep.subr.bf16.mxu0 0
    %1010 = vmatpush1.bf16.msra.mxu0 0
    %1011 = vmatprep.subr.bf16.mxu0 0
    %1012 = vmatpush1.bf16.msra.mxu0 0
    %1013 = vmatprep.mubr.bf16.mxu0 0
    %1014 = vmatmul.mubr.bf16.gmra.mrb[0].mxu0 %v138
    %v1015 = vpop.f32.mrb[0].mxu0
    %v1016 = vadd.f32 %v967, %v1015
    %v1017 = vpop.f32.mrb[0].mxu0
    %v1018 = vpop.f32.mrb[0].mxu0
    %v1019 = vpop.f32.mrb[0].mxu0
    %1020 = vdwg.mxu0
    %v1021 = vadd.f32 %v962, %v1016
    %v1022 = vxor.u32 %v1021, 2147483648
    %v1023 = vmul.f32 %v1022, 1.442695
    %v1024 = vpow.pop %v1023
    %v1025 = vadd.f32 %v1024, 1.0
    %v1026 = vrcp.pop %v1025
    %v1027 = vmul.f32 1.0, %v1026
    %1029 = vrot.lane.b32.xlu0 %v1016, 64
    %v1030 = vpop.permute.xlu0 %1029
    %v1032 = vmul.f32 %v1027, %v1030
    %1034 = vrot.lane.b32.xlu0 %v1032, 64
    %v1035 = vpop.permute.xlu0 %1034
    %v1037 = vadd.f32 %v962, %v1035
    %v1038 = vtanh.pop %v1037
    %v1039 = vsub.f32 1.0, %v1027
    %1041 = vrot.lane.b32.xlu0 %v1038, 96
    %v1042 = vpop.permute.xlu0 %1041
    %v1044 = vmul.f32 %v1039, %v1042
    %v1045 = vmul.f32 %v1027, 0.0
    %v1046 = vadd.f32 %v1044, %v1045
    %v1047 = vld [vmem:[%s1] sm:$0x3]
    %1049 = vset.pattern.permute.xlu0 0
    %1050 = vperm.xlu0 %1049, %v1047
    %v1051 = vpop.permute.xlu0 %1050
    %v1053 = vmul.f32 %v1051, %v1046
    %v1054 = vsub.f32 1.0, %v1047
    %1056 = vset.pattern.permute.xlu0 0
    %1057 = vperm.xlu0 %1056, %v1054
    %v1058 = vpop.permute.xlu0 %1057
    %v1060 = vmul.f32 %v1058, 0.0
    %v1061 = vadd.f32 %v1053, %v1060
    %v1062 = vld [vmem:[#allocation2 + $0x2] sm:$0x3]
    %v1063 = vpack.c.bf16 %v1061, %v1061
    %1065 = vrot.lane.b32.xlu0 %v1063, 96
    %v1066 = vpop.permute.xlu0 %1065
    %v1068 = vsel %vm136, %v1066, 0
    %1070 = vmatprep.subr.bf16.mxu0 0
    %1071 = vmatpush1.bf16.msra.mxu0 %v977
    %1072 = vmatprep.subr.bf16.mxu0 0
    %1073 = vmatpush1.bf16.msra.mxu0 %v978
    %1074 = vmatprep.subr.bf16.mxu0 0
    %1075 = vmatpush1.bf16.msra.mxu0 0
    %1076 = vmatprep.subr.bf16.mxu0 0
    %1077 = vmatpush1.bf16.msra.mxu0 0
    %1078 = vmatprep.subr.bf16.mxu0 0
    %1079 = vmatpush1.bf16.msra.mxu0 0
    %1080 = vmatprep.subr.bf16.mxu0 0
    %1081 = vmatpush1.bf16.msra.mxu0 0
    %1082 = vmatprep.subr.bf16.mxu0 0
    %1083 = vmatpush1.bf16.msra.mxu0 0
    %1084 = vmatprep.subr.bf16.mxu0 0
    %1085 = vmatpush1.bf16.msra.mxu0 0
    %1086 = vmatprep.subr.bf16.mxu0 0
    %1087 = vmatpush1.bf16.msra.mxu0 0
    %1088 = vmatprep.subr.bf16.mxu0 0
    %1089 = vmatpush1.bf16.msra.mxu0 0
    %1090 = vmatprep.subr.bf16.mxu0 0
    %1091 = vmatpush1.bf16.msra.mxu0 0
    %1092 = vmatprep.subr.bf16.mxu0 0
    %1093 = vmatpush1.bf16.msra.mxu0 0
    %1094 = vmatprep.subr.bf16.mxu0 0
    %1095 = vmatpush1.bf16.msra.mxu0 0
    %1096 = vmatprep.subr.bf16.mxu0 0
    %1097 = vmatpush1.bf16.msra.mxu0 0
    %1098 = vmatprep.subr.bf16.mxu0 0
    %1099 = vmatpush1.bf16.msra.mxu0 0
    %1100 = vmatprep.subr.bf16.mxu0 0
    %1101 = vmatpush1.bf16.msra.mxu0 0
    %1102 = vmatprep.mubr.bf16.mxu0 0
    %1103 = vmatmul.mubr.bf16.gmra.mrb[0].mxu0 %v1068
    %v1104 = vpop.f32.mrb[0].mxu0
    %v1105 = vadd.f32 %v967, %v1104
    %v1106 = vpop.f32.mrb[0].mxu0
    %v1107 = vpop.f32.mrb[0].mxu0
    %v1108 = vpop.f32.mrb[0].mxu0
    %1109 = vdwg.mxu0
    %v1110 = vadd.f32 %v1062, %v1105
    %v1111 = vxor.u32 %v1110, 2147483648
    %v1112 = vmul.f32 %v1111, 1.442695
    %v1113 = vpow.pop %v1112
    %v1114 = vadd.f32 %v1113, 1.0
    %v1115 = vrcp.pop %v1114
    %v1116 = vmul.f32 1.0, %v1115
    %1118 = vrot.lane.b32.xlu0 %v1105, 64
    %v1119 = vpop.permute.xlu0 %1118
    %v1121 = vmul.f32 %v1116, %v1119
    %1123 = vrot.lane.b32.xlu0 %v1121, 64
    %v1124 = vpop.permute.xlu0 %1123
    %v1126 = vadd.f32 %v1062, %v1124
    %v1127 = vtanh.pop %v1126
    %v1128 = vsub.f32 1.0, %v1116
    %1130 = vrot.lane.b32.xlu0 %v1127, 96
    %v1131 = vpop.permute.xlu0 %1130
    %v1133 = vmul.f32 %v1128, %v1131
    %v1134 = vmul.f32 %v1116, %v1061
    %v1135 = vadd.f32 %v1133, %v1134
    %v1136 = vld [vmem:[%s1 + $0x2] sm:$0x3]
    %1138 = vset.pattern.permute.xlu0 0
    %1139 = vperm.xlu0 %1138, %v1136
    %v1140 = vpop.permute.xlu0 %1139
    %v1142 = vmul.f32 %v1140, %v1135
    %v1143 = vsub.f32 1.0, %v1136
    %1145 = vset.pattern.permute.xlu0 0
    %1146 = vperm.xlu0 %1145, %v1143
    %v1147 = vpop.permute.xlu0 %1146
    %v1149 = vmul.f32 %v1147, %v1061
    %v1150 = vadd.f32 %v1142, %v1149
    %v1151 = vld [vmem:[#allocation2 + $0x4] sm:$0x3]
    %v1152 = vpack.c.bf16 %v1150, %v1150
    %1154 = vrot.lane.b32.xlu0 %v1152, 96
    %v1155 = vpop.permute.xlu0 %1154
    %v1157 = vsel %vm136, %v1155, 0
    %1159 = vmatprep.subr.bf16.mxu0 0
    %1160 = vmatpush1.bf16.msra.mxu0 %v977
    %1161 = vmatprep.subr.bf16.mxu0 0
    %1162 = vmatpush1.bf16.msra.mxu0 %v978
    %1163 = vmatprep.subr.bf16.mxu0 0
    %1164 = vmatpush1.bf16.msra.mxu0 0
    %1165 = vmatprep.subr.bf16.mxu0 0
    %1166 = vmatpush1.bf16.msra.mxu0 0
    %1167 = vmatprep.subr.bf16.mxu0 0
    %1168 = vmatpush1.bf16.msra.mxu0 0
    %1169 = vmatprep.subr.bf16.mxu0 0
    %1170 = vmatpush1.bf16.msra.mxu0 0
    %1171 = vmatprep.subr.bf16.mxu0 0
    %1172 = vmatpush1.bf16.msra.mxu0 0
    %1173 = vmatprep.subr.bf16.mxu0 0
    %1174 = vmatpush1.bf16.msra.mxu0 0
    %1175 = vmatprep.subr.bf16.mxu0 0
    %1176 = vmatpush1.bf16.msra.mxu0 0
    %1177 = vmatprep.subr.bf16.mxu0 0
    %1178 = vmatpush1.bf16.msra.mxu0 0
    %1179 = vmatprep.subr.bf16.mxu0 0
    %1180 = vmatpush1.bf16.msra.mxu0 0
    %1181 = vmatprep.subr.bf16.mxu0 0
    %1182 = vmatpush1.bf16.msra.mxu0 0
    %1183 = vmatprep.subr.bf16.mxu0 0
    %1184 = vmatpush1.bf16.msra.mxu0 0
    %1185 = vmatprep.subr.bf16.mxu0 0
    %1186 = vmatpush1.bf16.msra.mxu0 0
    %1187 = vmatprep.subr.bf16.mxu0 0
    %1188 = vmatpush1.bf16.msra.mxu0 0
    %1189 = vmatprep.subr.bf16.mxu0 0
    %1190 = vmatpush1.bf16.msra.mxu0 0
    %1191 = vmatprep.mubr.bf16.mxu0 0
    %1192 = vmatmul.mubr.bf16.gmra.mrb[0].mxu0 %v1157
    %v1193 = vpop.f32.mrb[0].mxu0
    %v1194 = vadd.f32 %v967, %v1193
    %v1195 = vpop.f32.mrb[0].mxu0
    %v1196 = vpop.f32.mrb[0].mxu0
    %v1197 = vpop.f32.mrb[0].mxu0
    %1198 = vdwg.mxu0
    %v1199 = vadd.f32 %v1151, %v1194
    %v1200 = vxor.u32 %v1199, 2147483648
    %v1201 = vmul.f32 %v1200, 1.442695
    %v1202 = vpow.pop %v1201
    %v1203 = vadd.f32 %v1202, 1.0
    %v1204 = vrcp.pop %v1203
    %v1205 = vmul.f32 1.0, %v1204
    %1207 = vrot.lane.b32.xlu0 %v1194, 64
    %v1208 = vpop.permute.xlu0 %1207
    %v1210 = vmul.f32 %v1205, %v1208
    %1212 = vrot.lane.b32.xlu0 %v1210, 64
    %v1213 = vpop.permute.xlu0 %1212
    %v1215 = vadd.f32 %v1151, %v1213
    %v1216 = vtanh.pop %v1215
    %v1217 = vsub.f32 1.0, %v1205
    %1219 = vrot.lane.b32.xlu0 %v1216, 96
    %v1220 = vpop.permute.xlu0 %1219
    %v1222 = vmul.f32 %v1217, %v1220
    %v1223 = vmul.f32 %v1205, %v1150
    %v1224 = vadd.f32 %v1222, %v1223
    %v1225 = vld [vmem:[%s1 + $0x4] sm:$0x3]
    %1227 = vset.pattern.permute.xlu0 0
    %1228 = vperm.xlu0 %1227, %v1225
    %v1229 = vpop.permute.xlu0 %1228
    %v1231 = vmul.f32 %v1229, %v1224
    %v1232 = vsub.f32 1.0, %v1225
    %1234 = vset.pattern.permute.xlu0 0
    %1235 = vperm.xlu0 %1234, %v1232
    %v1236 = vpop.permute.xlu0 %1235
    %v1238 = vmul.f32 %v1236, %v1150
    %v1239 = vadd.f32 %v1231, %v1238
    %v1240 = vld [vmem:[#allocation2 + $0x6] sm:$0x3]
    %v1241 = vpack.c.bf16 %v1239, %v1239
    %1243 = vrot.lane.b32.xlu0 %v1241, 96
    %v1244 = vpop.permute.xlu0 %1243
    %v1246 = vsel %vm136, %v1244, 0
    %1248 = vmatprep.subr.bf16.mxu0 0
    %1249 = vmatpush1.bf16.msra.mxu0 %v977
    %1250 = vmatprep.subr.bf16.mxu0 0
    %1251 = vmatpush1.bf16.msra.mxu0 %v978
    %1252 = vmatprep.subr.bf16.mxu0 0
    %1253 = vmatpush1.bf16.msra.mxu0 0
    %1254 = vmatprep.subr.bf16.mxu0 0
    %1255 = vmatpush1.bf16.msra.mxu0 0
    %1256 = vmatprep.subr.bf16.mxu0 0
    %1257 = vmatpush1.bf16.msra.mxu0 0
    %1258 = vmatprep.subr.bf16.mxu0 0
    %1259 = vmatpush1.bf16.msra.mxu0 0
    %1260 = vmatprep.subr.bf16.mxu0 0
    %1261 = vmatpush1.bf16.msra.mxu0 0
    %1262 = vmatprep.subr.bf16.mxu0 0
    %1263 = vmatpush1.bf16.msra.mxu0 0
    %1264 = vmatprep.subr.bf16.mxu0 0
    %1265 = vmatpush1.bf16.msra.mxu0 0
    %1266 = vmatprep.subr.bf16.mxu0 0
    %1267 = vmatpush1.bf16.msra.mxu0 0
    %1268 = vmatprep.subr.bf16.mxu0 0
    %1269 = vmatpush1.bf16.msra.mxu0 0
    %1270 = vmatprep.subr.bf16.mxu0 0
    %1271 = vmatpush1.bf16.msra.mxu0 0
    %1272 = vmatprep.subr.bf16.mxu0 0
    %1273 = vmatpush1.bf16.msra.mxu0 0
    %1274 = vmatprep.subr.bf16.mxu0 0
    %1275 = vmatpush1.bf16.msra.mxu0 0
    %1276 = vmatprep.subr.bf16.mxu0 0
    %1277 = vmatpush1.bf16.msra.mxu0 0
    %1278 = vmatprep.subr.bf16.mxu0 0
    %1279 = vmatpush1.bf16.msra.mxu0 0
    %1280 = vmatprep.mubr.bf16.mxu0 0
    %1281 = vmatmul.mubr.bf16.gmra.mrb[0].mxu0 %v1246
    %v1282 = vpop.f32.mrb[0].mxu0
    %v1283 = vadd.f32 %v967, %v1282
    %v1284 = vpop.f32.mrb[0].mxu0
    %v1285 = vpop.f32.mrb[0].mxu0
    %v1286 = vpop.f32.mrb[0].mxu0
    %1287 = vdwg.mxu0
    %v1288 = vadd.f32 %v1240, %v1283
    %v1289 = vxor.u32 %v1288, 2147483648
    %v1290 = vmul.f32 %v1289, 1.442695
    %v1291 = vpow.pop %v1290
    %v1292 = vadd.f32 %v1291, 1.0
    %v1293 = vrcp.pop %v1292
    %v1294 = vmul.f32 1.0, %v1293
    %1296 = vrot.lane.b32.xlu0 %v1283, 64
    %v1297 = vpop.permute.xlu0 %1296
    %v1299 = vmul.f32 %v1294, %v1297
    %1301 = vrot.lane.b32.xlu0 %v1299, 64
    %v1302 = vpop.permute.xlu0 %1301
    %v1304 = vadd.f32 %v1240, %v1302
    %v1305 = vtanh.pop %v1304
    %v1306 = vsub.f32 1.0, %v1294
    %1308 = vrot.lane.b32.xlu0 %v1305, 96
    %v1309 = vpop.permute.xlu0 %1308
    %v1311 = vmul.f32 %v1306, %v1309
    %v1312 = vmul.f32 %v1294, %v1239
    %v1313 = vadd.f32 %v1311, %v1312
    %v1314 = vld [vmem:[%s1 + $0x6] sm:$0x3]
    %1316 = vset.pattern.permute.xlu0 0
    %1317 = vperm.xlu0 %1316, %v1314
    %v1318 = vpop.permute.xlu0 %1317
    %v1320 = vmul.f32 %v1318, %v1313
    %v1321 = vsub.f32 1.0, %v1314
    %1323 = vset.pattern.permute.xlu0 0
    %1324 = vperm.xlu0 %1323, %v1321
    %v1325 = vpop.permute.xlu0 %1324
    %v1327 = vmul.f32 %v1325, %v1239
    %v1328 = vadd.f32 %v1320, %v1327
    %v1329 = vld [vmem:[#allocation2 + $0x8] sm:$0x3]
    %v1330 = vpack.c.bf16 %v1328, %v1328
    %1332 = vrot.lane.b32.xlu0 %v1330, 96
    %v1333 = vpop.permute.xlu0 %1332
    %v1335 = vsel %vm136, %v1333, 0
    %1337 = vmatprep.subr.bf16.mxu0 0
    %1338 = vmatpush1.bf16.msra.mxu0 %v977
    %1339 = vmatprep.subr.bf16.mxu0 0
    %1340 = vmatpush1.bf16.msra.mxu0 %v978
    %1341 = vmatprep.subr.bf16.mxu0 0
    %1342 = vmatpush1.bf16.msra.mxu0 0
    %1343 = vmatprep.subr.bf16.mxu0 0
    %1344 = vmatpush1.bf16.msra.mxu0 0
    %1345 = vmatprep.subr.bf16.mxu0 0
    %1346 = vmatpush1.bf16.msra.mxu0 0
    %1347 = vmatprep.subr.bf16.mxu0 0
    %1348 = vmatpush1.bf16.msra.mxu0 0
    %1349 = vmatprep.subr.bf16.mxu0 0
    %1350 = vmatpush1.bf16.msra.mxu0 0
    %1351 = vmatprep.subr.bf16.mxu0 0
    %1352 = vmatpush1.bf16.msra.mxu0 0
    %1353 = vmatprep.subr.bf16.mxu0 0
    %1354 = vmatpush1.bf16.msra.mxu0 0
    %1355 = vmatprep.subr.bf16.mxu0 0
    %1356 = vmatpush1.bf16.msra.mxu0 0
    %1357 = vmatprep.subr.bf16.mxu0 0
    %1358 = vmatpush1.bf16.msra.mxu0 0
    %1359 = vmatprep.subr.bf16.mxu0 0
    %1360 = vmatpush1.bf16.msra.mxu0 0
    %1361 = vmatprep.subr.bf16.mxu0 0
    %1362 = vmatpush1.bf16.msra.mxu0 0
    %1363 = vmatprep.subr.bf16.mxu0 0
    %1364 = vmatpush1.bf16.msra.mxu0 0
    %1365 = vmatprep.subr.bf16.mxu0 0
    %1366 = vmatpush1.bf16.msra.mxu0 0
    %1367 = vmatprep.subr.bf16.mxu0 0
    %1368 = vmatpush1.bf16.msra.mxu0 0
    %1369 = vmatprep.mubr.bf16.mxu0 0
    %1370 = vmatmul.mubr.bf16.gmra.mrb[0].mxu0 %v1335
    %v1371 = vpop.f32.mrb[0].mxu0
    %v1372 = vadd.f32 %v967, %v1371
    %v1373 = vpop.f32.mrb[0].mxu0
    %v1374 = vpop.f32.mrb[0].mxu0
    %v1375 = vpop.f32.mrb[0].mxu0
    %1376 = vdwg.mxu0
    %v1377 = vadd.f32 %v1329, %v1372
    %v1378 = vxor.u32 %v1377, 2147483648
    %v1379 = vmul.f32 %v1378, 1.442695
    %v1380 = vpow.pop %v1379
    %v1381 = vadd.f32 %v1380, 1.0
    %v1382 = vrcp.pop %v1381
    %v1383 = vmul.f32 1.0, %v1382
    %1385 = vrot.lane.b32.xlu0 %v1372, 64
    %v1386 = vpop.permute.xlu0 %1385
    %v1388 = vmul.f32 %v1383, %v1386
    %1390 = vrot.lane.b32.xlu0 %v1388, 64
    %v1391 = vpop.permute.xlu0 %1390
    %v1393 = vadd.f32 %v1329, %v1391
    %v1394 = vtanh.pop %v1393
    %v1395 = vsub.f32 1.0, %v1383
    %1397 = vrot.lane.b32.xlu0 %v1394, 96
    %v1398 = vpop.permute.xlu0 %1397
    %v1400 = vmul.f32 %v1395, %v1398
    %v1401 = vmul.f32 %v1383, %v1328
    %v1402 = vadd.f32 %v1400, %v1401
    %v1403 = vld [vmem:[%s1 + $0x8] sm:$0x3]
    %1405 = vset.pattern.permute.xlu0 0
    %1406 = vperm.xlu0 %1405, %v1403
    %v1407 = vpop.permute.xlu0 %1406
    %v1409 = vmul.f32 %v1407, %v1402
    %v1410 = vsub.f32 1.0, %v1403
    %1412 = vset.pattern.permute.xlu0 0
    %1413 = vperm.xlu0 %1412, %v1410
    %v1414 = vpop.permute.xlu0 %1413
    %v1416 = vmul.f32 %v1414, %v1328
    %v1417 = vadd.f32 %v1409, %v1416
    %v1418 = vld [vmem:[#allocation2 + $0xa] sm:$0x3]
    %v1419 = vpack.c.bf16 %v1417, %v1417
    %1421 = vrot.lane.b32.xlu0 %v1419, 96
    %v1422 = vpop.permute.xlu0 %1421
    %v1424 = vsel %vm136, %v1422, 0
    %1426 = vmatprep.subr.bf16.mxu0 0
    %1427 = vmatpush1.bf16.msra.mxu0 %v977
    %1428 = vmatprep.subr.bf16.mxu0 0
    %1429 = vmatpush1.bf16.msra.mxu0 %v978
    %1430 = vmatprep.subr.bf16.mxu0 0
    %1431 = vmatpush1.bf16.msra.mxu0 0
    %1432 = vmatprep.subr.bf16.mxu0 0
    %1433 = vmatpush1.bf16.msra.mxu0 0
    %1434 = vmatprep.subr.bf16.mxu0 0
    %1435 = vmatpush1.bf16.msra.mxu0 0
    %1436 = vmatprep.subr.bf16.mxu0 0
    %1437 = vmatpush1.bf16.msra.mxu0 0
    %1438 = vmatprep.subr.bf16.mxu0 0
    %1439 = vmatpush1.bf16.msra.mxu0 0
    %1440 = vmatprep.subr.bf16.mxu0 0
    %1441 = vmatpush1.bf16.msra.mxu0 0
    %1442 = vmatprep.subr.bf16.mxu0 0
    %1443 = vmatpush1.bf16.msra.mxu0 0
    %1444 = vmatprep.subr.bf16.mxu0 0
    %1445 = vmatpush1.bf16.msra.mxu0 0
    %1446 = vmatprep.subr.bf16.mxu0 0
    %1447 = vmatpush1.bf16.msra.mxu0 0
    %1448 = vmatprep.subr.bf16.mxu0 0
    %1449 = vmatpush1.bf16.msra.mxu0 0
    %1450 = vmatprep.subr.bf16.mxu0 0
    %1451 = vmatpush1.bf16.msra.mxu0 0
    %1452 = vmatprep.subr.bf16.mxu0 0
    %1453 = vmatpush1.bf16.msra.mxu0 0
    %1454 = vmatprep.subr.bf16.mxu0 0
    %1455 = vmatpush1.bf16.msra.mxu0 0
    %1456 = vmatprep.subr.bf16.mxu0 0
    %1457 = vmatpush1.bf16.msra.mxu0 0
    %1458 = vmatprep.mubr.bf16.mxu0 0
    %1459 = vmatmul.mubr.bf16.gmra.mrb[0].mxu0 %v1424
    %v1460 = vpop.f32.mrb[0].mxu0
    %v1461 = vadd.f32 %v967, %v1460
    %v1462 = vpop.f32.mrb[0].mxu0
    %v1463 = vpop.f32.mrb[0].mxu0
    %v1464 = vpop.f32.mrb[0].mxu0
    %1465 = vdwg.mxu0
    %v1466 = vadd.f32 %v1418, %v1461
    %v1467 = vxor.u32 %v1466, 2147483648
    %v1468 = vmul.f32 %v1467, 1.442695
    %v1469 = vpow.pop %v1468
    %v1470 = vadd.f32 %v1469, 1.0
    %v1471 = vrcp.pop %v1470
    %v1472 = vmul.f32 1.0, %v1471
    %1474 = vrot.lane.b32.xlu0 %v1461, 64
    %v1475 = vpop.permute.xlu0 %1474
    %v1477 = vmul.f32 %v1472, %v1475
    %1479 = vrot.lane.b32.xlu0 %v1477, 64
    %v1480 = vpop.permute.xlu0 %1479
    %v1482 = vadd.f32 %v1418, %v1480
    %v1483 = vtanh.pop %v1482
    %v1484 = vsub.f32 1.0, %v1472
    %1486 = vrot.lane.b32.xlu0 %v1483, 96
    %v1487 = vpop.permute.xlu0 %1486
    %v1489 = vmul.f32 %v1484, %v1487
    %v1490 = vmul.f32 %v1472, %v1417
    %v1491 = vadd.f32 %v1489, %v1490
    %v1492 = vld [vmem:[%s1 + $0xa] sm:$0x3]
    %1494 = vset.pattern.permute.xlu0 0
    %1495 = vperm.xlu0 %1494, %v1492
    %v1496 = vpop.permute.xlu0 %1495
    %v1498 = vmul.f32 %v1496, %v1491
    %v1499 = vsub.f32 1.0, %v1492
    %1501 = vset.pattern.permute.xlu0 0
    %1502 = vperm.xlu0 %1501, %v1499
    %v1503 = vpop.permute.xlu0 %1502
    %v1505 = vmul.f32 %v1503, %v1417
    %v1506 = vadd.f32 %v1498, %v1505
    %v1507 = vld [vmem:[#allocation2 + $0xc] sm:$0x3]
    %v1508 = vpack.c.bf16 %v1506, %v1506
    %1510 = vrot.lane.b32.xlu0 %v1508, 96
    %v1511 = vpop.permute.xlu0 %1510
    %v1513 = vsel %vm136, %v1511, 0
    %1515 = vmatprep.subr.bf16.mxu0 0
    %1516 = vmatpush1.bf16.msra.mxu0 %v977
    %1517 = vmatprep.subr.bf16.mxu0 0
    %1518 = vmatpush1.bf16.msra.mxu0 %v978
    %1519 = vmatprep.subr.bf16.mxu0 0
    %1520 = vmatpush1.bf16.msra.mxu0 0
    %1521 = vmatprep.subr.bf16.mxu0 0
    %1522 = vmatpush1.bf16.msra.mxu0 0
    %1523 = vmatprep.subr.bf16.mxu0 0
    %1524 = vmatpush1.bf16.msra.mxu0 0
    %1525 = vmatprep.subr.bf16.mxu0 0
    %1526 = vmatpush1.bf16.msra.mxu0 0
    %1527 = vmatprep.subr.bf16.mxu0 0
    %1528 = vmatpush1.bf16.msra.mxu0 0
    %1529 = vmatprep.subr.bf16.mxu0 0
    %1530 = vmatpush1.bf16.msra.mxu0 0
    %1531 = vmatprep.subr.bf16.mxu0 0
    %1532 = vmatpush1.bf16.msra.mxu0 0
    %1533 = vmatprep.subr.bf16.mxu0 0
    %1534 = vmatpush1.bf16.msra.mxu0 0
    %1535 = vmatprep.subr.bf16.mxu0 0
    %1536 = vmatpush1.bf16.msra.mxu0 0
    %1537 = vmatprep.subr.bf16.mxu0 0
    %1538 = vmatpush1.bf16.msra.mxu0 0
    %1539 = vmatprep.subr.bf16.mxu0 0
    %1540 = vmatpush1.bf16.msra.mxu0 0
    %1541 = vmatprep.subr.bf16.mxu0 0
    %1542 = vmatpush1.bf16.msra.mxu0 0
    %1543 = vmatprep.subr.bf16.mxu0 0
    %1544 = vmatpush1.bf16.msra.mxu0 0
    %1545 = vmatprep.subr.bf16.mxu0 0
    %1546 = vmatpush1.bf16.msra.mxu0 0
    %1547 = vmatprep.mubr.bf16.mxu0 0
    %1548 = vmatmul.mubr.bf16.gmra.mrb[0].mxu0 %v1513
    %v1549 = vpop.f32.mrb[0].mxu0
    %v1550 = vadd.f32 %v967, %v1549
    %v1551 = vpop.f32.mrb[0].mxu0
    %v1552 = vpop.f32.mrb[0].mxu0
    %v1553 = vpop.f32.mrb[0].mxu0
    %1554 = vdwg.mxu0
    %v1555 = vadd.f32 %v1507, %v1550
    %v1556 = vxor.u32 %v1555, 2147483648
    %v1557 = vmul.f32 %v1556, 1.442695
    %v1558 = vpow.pop %v1557
    %v1559 = vadd.f32 %v1558, 1.0
    %v1560 = vrcp.pop %v1559
    %v1561 = vmul.f32 1.0, %v1560
    %1563 = vrot.lane.b32.xlu0 %v1550, 64
    %v1564 = vpop.permute.xlu0 %1563
    %v1566 = vmul.f32 %v1561, %v1564
    %1568 = vrot.lane.b32.xlu0 %v1566, 64
    %v1569 = vpop.permute.xlu0 %1568
    %v1571 = vadd.f32 %v1507, %v1569
    %v1572 = vtanh.pop %v1571
    %v1573 = vsub.f32 1.0, %v1561
    %1575 = vrot.lane.b32.xlu0 %v1572, 96
    %v1576 = vpop.permute.xlu0 %1575
    %v1578 = vmul.f32 %v1573, %v1576
    %v1579 = vmul.f32 %v1561, %v1506
    %v1580 = vadd.f32 %v1578, %v1579
    %v1581 = vld [vmem:[%s1 + $0xc] sm:$0x3]
    %1583 = vset.pattern.permute.xlu0 0
    %1584 = vperm.xlu0 %1583, %v1581
    %v1585 = vpop.permute.xlu0 %1584
    %v1587 = vmul.f32 %v1585, %v1580
    %v1588 = vsub.f32 1.0, %v1581
    %1590 = vset.pattern.permute.xlu0 0
    %1591 = vperm.xlu0 %1590, %v1588
    %v1592 = vpop.permute.xlu0 %1591
    %v1594 = vmul.f32 %v1592, %v1506
    %v1595 = vadd.f32 %v1587, %v1594
    %v1596 = vld [vmem:[#allocation2 + $0xe] sm:$0x3]
    %v1597 = vpack.c.bf16 %v1595, %v1595
    %1599 = vrot.lane.b32.xlu0 %v1597, 96
    %v1600 = vpop.permute.xlu0 %1599
    %v1602 = vsel %vm136, %v1600, 0
    %1604 = vmatprep.subr.bf16.mxu0 0
    %1605 = vmatpush1.bf16.msra.mxu0 %v977
    %1606 = vmatprep.subr.bf16.mxu0 0
    %1607 = vmatpush1.bf16.msra.mxu0 %v978
    %1608 = vmatprep.subr.bf16.mxu0 0
    %1609 = vmatpush1.bf16.msra.mxu0 0
    %1610 = vmatprep.subr.bf16.mxu0 0
    %1611 = vmatpush1.bf16.msra.mxu0 0
    %1612 = vmatprep.subr.bf16.mxu0 0
    %1613 = vmatpush1.bf16.msra.mxu0 0
    %1614 = vmatprep.subr.bf16.mxu0 0
    %1615 = vmatpush1.bf16.msra.mxu0 0
    %1616 = vmatprep.subr.bf16.mxu0 0
    %1617 = vmatpush1.bf16.msra.mxu0 0
    %1618 = vmatprep.subr.bf16.mxu0 0
    %1619 = vmatpush1.bf16.msra.mxu0 0
    %1620 = vmatprep.subr.bf16.mxu0 0
    %1621 = vmatpush1.bf16.msra.mxu0 0
    %1622 = vmatprep.subr.bf16.mxu0 0
    %1623 = vmatpush1.bf16.msra.mxu0 0
    %1624 = vmatprep.subr.bf16.mxu0 0
    %1625 = vmatpush1.bf16.msra.mxu0 0
    %1626 = vmatprep.subr.bf16.mxu0 0
    %1627 = vmatpush1.bf16.msra.mxu0 0
    %1628 = vmatprep.subr.bf16.mxu0 0
    %1629 = vmatpush1.bf16.msra.mxu0 0
    %1630 = vmatprep.subr.bf16.mxu0 0
    %1631 = vmatpush1.bf16.msra.mxu0 0
    %1632 = vmatprep.subr.bf16.mxu0 0
    %1633 = vmatpush1.bf16.msra.mxu0 0
    %1634 = vmatprep.subr.bf16.mxu0 0
    %1635 = vmatpush1.bf16.msra.mxu0 0
    %1636 = vmatprep.mubr.bf16.mxu0 0
    %1637 = vmatmul.mubr.bf16.gmra.mrb[0].mxu0 %v1602
    %v1638 = vpop.f32.mrb[0].mxu0
    %v1639 = vadd.f32 %v967, %v1638
    %v1640 = vpop.f32.mrb[0].mxu0
    %v1641 = vpop.f32.mrb[0].mxu0
    %v1642 = vpop.f32.mrb[0].mxu0
    %1643 = vdwg.mxu0
    %v1644 = vadd.f32 %v1596, %v1639
    %v1645 = vxor.u32 %v1644, 2147483648
    %v1646 = vmul.f32 %v1645, 1.442695
    %v1647 = vpow.pop %v1646
    %v1648 = vadd.f32 %v1647, 1.0
    %v1649 = vrcp.pop %v1648
    %v1650 = vmul.f32 1.0, %v1649
    %1652 = vrot.lane.b32.xlu0 %v1639, 64
    %v1653 = vpop.permute.xlu0 %1652
    %v1655 = vmul.f32 %v1650, %v1653
    %1657 = vrot.lane.b32.xlu0 %v1655, 64
    %v1658 = vpop.permute.xlu0 %1657
    %v1660 = vadd.f32 %v1596, %v1658
    %v1661 = vtanh.pop %v1660
    %v1662 = vsub.f32 1.0, %v1650
    %1664 = vrot.lane.b32.xlu0 %v1661, 96
    %v1665 = vpop.permute.xlu0 %1664
    %v1667 = vmul.f32 %v1662, %v1665
    %v1668 = vmul.f32 %v1650, %v1595
    %v1669 = vadd.f32 %v1667, %v1668
    %v1670 = vld [vmem:[%s1 + $0xe] sm:$0x3]
    %1672 = vset.pattern.permute.xlu0 0
    %1673 = vperm.xlu0 %1672, %v1670
    %v1674 = vpop.permute.xlu0 %1673
    %v1676 = vmul.f32 %v1674, %v1669
    %v1677 = vsub.f32 1.0, %v1670
    %1679 = vset.pattern.permute.xlu0 0
    %1680 = vperm.xlu0 %1679, %v1677
    %v1681 = vpop.permute.xlu0 %1680
    %v1683 = vmul.f32 %v1681, %v1595
    %v1684 = vadd.f32 %v1676, %v1683
    %v1685 = vpack.c.bf16 %v1684, %v1684
    %v1686 = vld [vmem:[%s10] sm:$0xf]
    %v1687 = vld [vmem:[%s10 + $0x4] sm:$0xf]
    %v1688 = vld [vmem:[%s10 + $0x8] sm:$0xf]
    %v1689 = vld [vmem:[%s10 + $0xc] sm:$0xf]
    %v1690 = vld [vmem:[%s11] sm:$0x1]
    %v1692 = vlaneseq
    %v1693 = vshrl.u32 %v1692, 7
    %v1694 = vsub.s32 0, %v1693
    %v1695 = vrot.slane %v1690, %v1694
    %1698 = vrot.lane.b32.xlu0 %v1685, 96
    %v1699 = vpop.permute.xlu0 %1698
    %v1704 = vunpack.c.l.b16 %v1686
    %v1705 = vunpack.c.l.b16 %v1687
    %v1706 = vunpack.c.l.b16 %v1688
    %v1707 = vunpack.c.l.b16 %v1689
    %v1708 = vpack.c.b16 %v1705, %v1704
    %v1709 = vpack.c.b16 %v1707, %v1706
    %v1713 = vsel %vm136, %v1699, 0
    %1715 = vmatprep.subr.bf16.mxu0 0
    %1716 = vmatpush1.bf16.msra.mxu0 %v1708
    %1717 = vmatprep.subr.bf16.mxu0 0
    %1718 = vmatpush1.bf16.msra.mxu0 %v1709
    %1719 = vmatprep.subr.bf16.mxu0 0
    %1720 = vmatpush1.bf16.msra.mxu0 0
    %1721 = vmatprep.subr.bf16.mxu0 0
    %1722 = vmatpush1.bf16.msra.mxu0 0
    %1723 = vmatprep.subr.bf16.mxu0 0
    %1724 = vmatpush1.bf16.msra.mxu0 0
    %1725 = vmatprep.subr.bf16.mxu0 0
    %1726 = vmatpush1.bf16.msra.mxu0 0
    %1727 = vmatprep.subr.bf16.mxu0 0
    %1728 = vmatpush1.bf16.msra.mxu0 0
    %1729 = vmatprep.subr.bf16.mxu0 0
    %1730 = vmatpush1.bf16.msra.mxu0 0
    %1731 = vmatprep.subr.bf16.mxu0 0
    %1732 = vmatpush1.bf16.msra.mxu0 0
    %1733 = vmatprep.subr.bf16.mxu0 0
    %1734 = vmatpush1.bf16.msra.mxu0 0
    %1735 = vmatprep.subr.bf16.mxu0 0
    %1736 = vmatpush1.bf16.msra.mxu0 0
    %1737 = vmatprep.subr.bf16.mxu0 0
    %1738 = vmatpush1.bf16.msra.mxu0 0
    %1739 = vmatprep.subr.bf16.mxu0 0
    %1740 = vmatpush1.bf16.msra.mxu0 0
    %1741 = vmatprep.subr.bf16.mxu0 0
    %1742 = vmatpush1.bf16.msra.mxu0 0
    %1743 = vmatprep.subr.bf16.mxu0 0
    %1744 = vmatpush1.bf16.msra.mxu0 0
    %1745 = vmatprep.subr.bf16.mxu0 0
    %1746 = vmatpush1.bf16.msra.mxu0 0
    %1747 = vmatprep.mubr.bf16.mxu0 0
    %1748 = vmatmul.mubr.bf16.gmra.mrb[0].mxu0 %v1713
    %v1749 = vpop.f32.mrb[0].mxu0
    %v1750 = vadd.f32 %v1695, %v1749
    %v1751 = vpop.f32.mrb[0].mxu0
    %v1752 = vpop.f32.mrb[0].mxu0
    %v1753 = vpop.f32.mrb[0].mxu0
    %1754 = vdwg.mxu0
    %vm1755 = vcmask 25600
    %1756 = vst.msk [vmem:[#allocation4] sm:$0x3] %vm1755, %v1750
    // Predicated region
    $region50: #{recurrent_network_forward.1} parent=1 // pred_check
      _
    $region51: #{recurrent_network_forward.1} parent=1 // pred_check_branch
      %1758 = sbr.rel (0) target = $region53
    $region52: #{recurrent_network_forward.1} parent=1 // pred_region
      %s1760 = ssub.s32 32, 32
      %1761 = vsyncadd [#allocation5], %s1760
      %s1763 = sshll.u32 [#allocation4], 4
      %s1764 = int_to_ptr.vmem [resolvable:$true] %s1763
      %1766 = dma.vmem_to_hbm [thread:$0]  %s1764, 32, %s12, [#allocation5]
    $region53: #{recurrent_network_forward.1} parent=1 // pred_fallthru
      _
    // Predicated region
    $region54: #{recurrent_network_forward.1} parent=1 // pred_check
      _
    $region55: #{recurrent_network_forward.1} parent=1 // pred_check_branch
      %1768 = sbr.rel (0) target = $region57
    $region56: #{recurrent_network_forward.1} parent=1 // pred_region
      %1769 = dma.done [#allocation5], 32
    $region57: #{recurrent_network_forward.1} parent=1 // pred_fallthru
      _
    %1770 = vsyncpa [#allocation5], 1

</llo_original>
